<compile_context>
chip_gen: v7x
topology: tpu7x:2x2x1
jax: 0.10.0
libtpu: 0.0.40
codegen_flags: <defaults>
</compile_context>

<pallas_src>
import functools

import jax
import jax.numpy as jnp
from jax.experimental import pallas as pl
from jax.experimental.pallas import tpu as pltpu

# ----------------------------- config ---------------------------------------
B, C_IN, H_IMG, W_IMG = 2, 4, 16, 16
D_IN = C_IN * H_IMG * W_IMG          # 1024
HID = 128                            # encoder hidden width
FEAT = 128                           # encoder feature width
NUM_CLASSES = 16
DATASETS = ("dsA", "dsB")            # exam_datasets
N_DATASETS = len(DATASETS)
N_TASKS = 2                          # number of task vectors
N_MODELS = 1 + N_TASKS               # pretrained + task vectors
N_LAYERS = 4                         # (w1, b1, w2, b2) of the encoder

B_PAD = 8                            # batch padded to one sublane quantum
OUT_PAD = 128                        # lane-dense output per dataset (16 -> 128)
OUT_ALL = N_DATASETS * OUT_PAD       # all dataset heads evaluated in one call


# --------------------------- fused Pallas kernel -----------------------------
def _adamerging_fwd_kernel(lam_ref, x_ref, sw1_ref, sb1_ref, sw2c_ref, b2c_ref,
                           bc_ref, o_ref, *, n_models):
    """AdaMerging merge + encoder + all heads, fully on the MXU.

    The layer-wise weighted sum is applied to per-model matmul RESULTS
    (8x128-class f32 tiles, ~2 vregs each) instead of to the weight matrices,
    so no merged weights are ever materialized.  All matmul operands are bf16
    (native MXU path on v5e/v6e/v7x) with f32 accumulation."""
    # Hoist all lambda scalar reads from SMEM once (JAX does not CSE broadcasts).
    lam = [[lam_ref[j * n_models + m] for m in range(n_models)]
           for j in range(N_LAYERS)]

    x = x_ref[...]                                           # (B_PAD, D_IN) bf16

    # Layer 1 (w1): merge on the MXU.
    h = jnp.dot(x, sw1_ref[0], preferred_element_type=jnp.float32) * lam[0][0]
    for m in range(1, n_models):
        h = h + jnp.dot(x, sw1_ref[m],
                        preferred_element_type=jnp.float32) * lam[0][m]

    # Layer 2 (b1): tiny (1, HID) f32 merge in registers.
    b1 = sb1_ref[0] * lam[1][0]
    for m in range(1, n_models):
        b1 = b1 + sb1_ref[m] * lam[1][m]

    h = jnp.maximum(h + b1, 0.0).astype(jnp.bfloat16)        # (B_PAD, HID) bf16

    # Layer 3 (w2, head-folded): merge on the MXU; covers every dataset head.
    out = jnp.dot(h, sw2c_ref[0], preferred_element_type=jnp.float32) * lam[2][0]
    for m in range(1, n_models):
        out = out + jnp.dot(h, sw2c_ref[m],
                            preferred_element_type=jnp.float32) * lam[2][m]

    # Layer 4 (b2, head-folded): tiny (1, OUT_ALL) f32 merge in registers.
    b2c = b2c_ref[0] * lam[3][0]
    for m in range(1, n_models):
        b2c = b2c + b2c_ref[m] * lam[3][m]

    o_ref[...] = out + b2c + bc_ref[...]                     # lane-dense store


def _fused_forward(alph_flat, x_pad, sw1, sb1, sw2c, b2c, bc_all):
    smem = pl.BlockSpec(memory_space=pltpu.MemorySpace.SMEM)
    vmem = pl.BlockSpec(memory_space=pltpu.MemorySpace.VMEM)
    return pl.pallas_call(
        functools.partial(_adamerging_fwd_kernel, n_models=N_MODELS),
        out_shape=jax.ShapeDtypeStruct((B_PAD, OUT_ALL), jnp.float32),
        in_specs=[smem, vmem, vmem, vmem, vmem, vmem, vmem],
        out_specs=vmem,
    )(alph_flat, x_pad, sw1, sb1, sw2c, b2c, bc_all)


@jax.jit
def _forward_impl(x_nchw, lambdas_raw, pretrain_lambdas,
                  sw1, sb1, sw2c, b2c, bc_all):
    # lambdas(): clamp task coefficients, prepend the fixed pretrained column of 1s.
    alph = jnp.concatenate((pretrain_lambdas,
                            jnp.clip(lambdas_raw, 0.0, 1.0)), axis=1)
    alph_flat = alph.reshape(-1).astype(jnp.float32)   # (N_LAYERS * N_MODELS,)

    b = x_nchw.shape[0]
    x2d = x_nchw.reshape(b, -1).astype(jnp.bfloat16)   # bf16 activation path
    x_pad = jnp.pad(x2d, ((0, B_PAD - b), (0, 0)))     # pad batch to a sublane

    out = _fused_forward(alph_flat, x_pad, sw1, sb1, sw2c, b2c, bc_all)
    return out[:b]                                     # (b, OUT_ALL)


# ----------------------------- AdaMerging module -----------------------------
class AdaMergingPallas:
    """Layer-wise AdaMerging over (pretrained + task-vector) encoder params."""

    def __init__(self, paramslist, heads):
        # paramslist: list over models; each element is a tuple of N_LAYERS tensors.
        self.paramslist = paramslist
        self.heads = heads
        n_layers = len(paramslist[0])
        n_models = len(paramslist)
        self.pretrain_lambdas = jnp.ones((n_layers, 1), jnp.float32)
        self.lambdas_raw = jnp.ones((n_layers, n_models - 1), jnp.float32) * 0.3

        # Pre-stack per-layer params across models ONCE (bf16 storage in HBM for
        # matmul operands; biases stay f32 — they are tiny).
        self.sw1 = jnp.stack([p[0] for p in paramslist]).astype(jnp.bfloat16)
        self.sb1 = jnp.stack([p[1].reshape(1, -1)
                              for p in paramslist]).astype(jnp.float32)

        # All per-dataset classification heads packed lane-dense side by side
        # (columns [d*OUT_PAD : d*OUT_PAD+NUM_CLASSES]) so one kernel launch
        # evaluates every head.  Head is lambda-independent, so it is folded
        # into the w2 stage per model:  sw2c[m] = w2_m @ wc,  b2c[m] = b2_m @ wc.
        wc_all = jnp.zeros((FEAT, OUT_ALL), jnp.float32)
        bc_all = jnp.zeros((1, OUT_ALL), jnp.float32)
        self._ds_index = {}
        for d, name in enumerate(DATASETS):
            wc, bc = heads[name]
            col = d * OUT_PAD
            wc_all = wc_all.at[:, col:col + NUM_CLASSES].set(wc)
            bc_all = bc_all.at[:, col:col + NUM_CLASSES].set(bc)
            self._ds_index[name] = d
        self.sw2c = jnp.stack(
            [p[2].astype(jnp.float32) @ wc_all for p in paramslist]
        ).astype(jnp.bfloat16)                                   # (M, HID, OUT_ALL)
        self.b2c = jnp.stack(
            [p[3].reshape(1, -1).astype(jnp.float32) @ wc_all for p in paramslist]
        ).astype(jnp.float32)                                    # (M, 1, OUT_ALL)
        self.bc_all = bc_all

    def lambdas(self):
        task_lambdas = jnp.clip(self.lambdas_raw, 0.0, 1.0)
        return jnp.concatenate((self.pretrain_lambdas, task_lambdas), axis=1)

    def forward_all(self, inp_nchw):
        """One fused launch producing logits for every exam dataset."""
        return _forward_impl(inp_nchw, self.lambdas_raw, self.pretrain_lambdas,
                             self.sw1, self.sb1, self.sw2c, self.b2c, self.bc_all)

    def forward(self, inp_nchw, dataset_name):
        out_all = self.forward_all(inp_nchw)
        col = self._ds_index[dataset_name] * OUT_PAD
        return out_all[:, col:col + NUM_CLASSES]


# --------------------------------- main --------------------------------------
def _init_encoder_params(key, scale):
    k1, k2, k3, k4 = jax.random.split(key, 4)
    return (jax.random.normal(k1, (D_IN, HID), jnp.float32) * scale,
            jax.random.normal(k2, (HID,), jnp.float32) * scale,
            jax.random.normal(k3, (HID, FEAT), jnp.float32) * scale,
            jax.random.normal(k4, (FEAT,), jnp.float32) * scale)


def _reference(x_nchw, module, dataset_name):
    # pure-JAX f32 reference (PyTorch semantics): merge, encoder, head.
    alph = module.lambdas()
    merged = []
    for j in range(N_LAYERS):
        merged.append(sum(module.paramslist[m][j] * alph[j, m]
                          for m in range(N_MODELS)))
    w1, b1, w2, b2 = merged
    wc, bc = module.heads[dataset_name]
    x = x_nchw.reshape(x_nchw.shape[0], -1)
    h = jnp.maximum(x @ w1 + b1, 0.0)
    f = h @ w2 + b2
    return f @ wc + bc


if __name__ == "__main__":
    key = jax.random.PRNGKey(0)
    k_x, k_pt, k_t1, k_t2, k_h1, k_h2 = jax.random.split(key, 6)

    # input batch of NCHW images
    x = jax.random.normal(k_x, (B, C_IN, H_IMG, W_IMG), jnp.float32)

    # paramslist[0] = pretrained encoder params, rest = task vectors
    paramslist = [
        _init_encoder_params(k_pt, 0.02),
        _init_encoder_params(k_t1, 0.005),
        _init_encoder_params(k_t2, 0.005),
    ]

    # per-dataset classification heads (not merged, as in the original module)
    heads = {}
    for name, kh in zip(DATASETS, (k_h1, k_h2)):
        kw, kb = jax.random.split(kh)
        heads[name] = (jax.random.normal(kw, (FEAT, NUM_CLASSES), jnp.float32) * 0.05,
                       jax.random.normal(kb, (NUM_CLASSES,), jnp.float32) * 0.05)

    module = AdaMergingPallas(paramslist, heads)

    out = module.forward(x, "dsA")
    out = jax.block_until_ready(out)

    # NOTE: params/activations use bf16 matmul operands with f32 accumulation,
    # so the result will not bit-match the f32 reference (tolerance below).
    ref = _reference(x, module, "dsA")
    assert out.shape == (B, NUM_CLASSES)
    assert jnp.all(jnp.isfinite(out))
    max_err = float(jnp.max(jnp.abs(out - ref)))
    scale = float(jnp.max(jnp.abs(ref))) + 1.0
    assert max_err <= 5e-2 * scale, f"mismatch dsA: max_err={max_err}"

    # second dataset: same fused launch already covers it; exercise the slice path
    out_b = jax.block_until_ready(module.forward(x, "dsB"))
    ref_b = _reference(x, module, "dsB")
    assert out_b.shape == (B, NUM_CLASSES)
    max_err_b = float(jnp.max(jnp.abs(out_b - ref_b)))
    scale_b = float(jnp.max(jnp.abs(ref_b))) + 1.0
    assert max_err_b <= 5e-2 * scale_b, f"mismatch dsB: max_err={max_err_b}"

    # all-heads-in-one-launch path (amortizes launch + weight DMA across datasets)
    out_all = jax.block_until_ready(module.forward_all(x))
    assert out_all.shape == (B, OUT_ALL)

    print("KERNEL_OK")
</pallas_src>

<mosaic_0001>
module attributes {stable_mosaic.version = 11 : i64} {
  func.func @_adamerging_fwd_kernel(%arg0: memref<12xf32, #tpu.memory_space<smem>>, %arg1: memref<8x1024xbf16, #tpu.memory_space<vmem>>, %arg2: memref<3x1024x128xbf16, #tpu.memory_space<vmem>>, %arg3: memref<3x1x128xf32, #tpu.memory_space<vmem>>, %arg4: memref<3x128x256xbf16, #tpu.memory_space<vmem>>, %arg5: memref<3x1x256xf32, #tpu.memory_space<vmem>>, %arg6: memref<1x256xf32, #tpu.memory_space<vmem>>, %arg7: memref<8x256xf32, #tpu.memory_space<vmem>>) attributes {dimension_semantics = [], scalar_prefetch = 0 : i64, scratch_operands = 0 : i64, tpu.core_type = #tpu.core_type<tc>} {
    %c0 = arith.constant 0 : index
    %0 = memref.load %arg0[%c0] : memref<12xf32, #tpu.memory_space<smem>>
    %c1 = arith.constant 1 : index
    %1 = memref.load %arg0[%c1] : memref<12xf32, #tpu.memory_space<smem>>
    %c2 = arith.constant 2 : index
    %2 = memref.load %arg0[%c2] : memref<12xf32, #tpu.memory_space<smem>>
    %c3 = arith.constant 3 : index
    %3 = memref.load %arg0[%c3] : memref<12xf32, #tpu.memory_space<smem>>
    %c4 = arith.constant 4 : index
    %4 = memref.load %arg0[%c4] : memref<12xf32, #tpu.memory_space<smem>>
    %c5 = arith.constant 5 : index
    %5 = memref.load %arg0[%c5] : memref<12xf32, #tpu.memory_space<smem>>
    %c6 = arith.constant 6 : index
    %6 = memref.load %arg0[%c6] : memref<12xf32, #tpu.memory_space<smem>>
    %c7 = arith.constant 7 : index
    %7 = memref.load %arg0[%c7] : memref<12xf32, #tpu.memory_space<smem>>
    %c8 = arith.constant 8 : index
    %8 = memref.load %arg0[%c8] : memref<12xf32, #tpu.memory_space<smem>>
    %c9 = arith.constant 9 : index
    %9 = memref.load %arg0[%c9] : memref<12xf32, #tpu.memory_space<smem>>
    %c10 = arith.constant 10 : index
    %10 = memref.load %arg0[%c10] : memref<12xf32, #tpu.memory_space<smem>>
    %c11 = arith.constant 11 : index
    %11 = memref.load %arg0[%c11] : memref<12xf32, #tpu.memory_space<smem>>
    %c0_0 = arith.constant 0 : index
    %c0_1 = arith.constant 0 : index
    %12 = vector.load %arg1[%c0_0, %c0_1] : memref<8x1024xbf16, #tpu.memory_space<vmem>>, vector<8x1024xbf16>
    %c0_2 = arith.constant 0 : index
    %c0_3 = arith.constant 0 : index
    %c0_4 = arith.constant 0 : index
    %13 = vector.load %arg2[%c0_2, %c0_3, %c0_4] : memref<3x1024x128xbf16, #tpu.memory_space<vmem>>, vector<1x1024x128xbf16>
    %14 = vector.shape_cast %13 : vector<1x1024x128xbf16> to vector<1024x128xbf16>
    %cst = arith.constant dense<0.000000e+00> : vector<8x128xf32>
    %15 = tpu.matmul %12, %14, %cst {dimension_numbers = #tpu.dot_dimension_numbers<[1], [0], [0], [1], [0, 0, 1, 1], [], []>} : vector<8x1024xbf16>, vector<1024x128xbf16>, vector<8x128xf32> -> vector<8x128xf32>
    %16 = vector.broadcast %0 : f32 to vector<8x128xf32>
    %17 = arith.mulf %15, %16 : vector<8x128xf32>
    %c1_5 = arith.constant 1 : index
    %c0_6 = arith.constant 0 : index
    %c0_7 = arith.constant 0 : index
    %18 = vector.load %arg2[%c1_5, %c0_6, %c0_7] : memref<3x1024x128xbf16, #tpu.memory_space<vmem>>, vector<1x1024x128xbf16>
    %19 = vector.shape_cast %18 : vector<1x1024x128xbf16> to vector<1024x128xbf16>
    %cst_8 = arith.constant dense<0.000000e+00> : vector<8x128xf32>
    %20 = tpu.matmul %12, %19, %cst_8 {dimension_numbers = #tpu.dot_dimension_numbers<[1], [0], [0], [1], [0, 0, 1, 1], [], []>} : vector<8x1024xbf16>, vector<1024x128xbf16>, vector<8x128xf32> -> vector<8x128xf32>
    %21 = vector.broadcast %1 : f32 to vector<8x128xf32>
    %22 = arith.mulf %20, %21 : vector<8x128xf32>
    %23 = arith.addf %17, %22 : vector<8x128xf32>
    %c2_9 = arith.constant 2 : index
    %c0_10 = arith.constant 0 : index
    %c0_11 = arith.constant 0 : index
    %24 = vector.load %arg2[%c2_9, %c0_10, %c0_11] : memref<3x1024x128xbf16, #tpu.memory_space<vmem>>, vector<1x1024x128xbf16>
    %25 = vector.shape_cast %24 : vector<1x1024x128xbf16> to vector<1024x128xbf16>
    %cst_12 = arith.constant dense<0.000000e+00> : vector<8x128xf32>
    %26 = tpu.matmul %12, %25, %cst_12 {dimension_numbers = #tpu.dot_dimension_numbers<[1], [0], [0], [1], [0, 0, 1, 1], [], []>} : vector<8x1024xbf16>, vector<1024x128xbf16>, vector<8x128xf32> -> vector<8x128xf32>
    %27 = vector.broadcast %2 : f32 to vector<8x128xf32>
    %28 = arith.mulf %26, %27 : vector<8x128xf32>
    %29 = arith.addf %23, %28 : vector<8x128xf32>
    %c0_13 = arith.constant 0 : index
    %c0_14 = arith.constant 0 : index
    %c0_15 = arith.constant 0 : index
    %30 = vector.load %arg3[%c0_13, %c0_14, %c0_15] : memref<3x1x128xf32, #tpu.memory_space<vmem>>, vector<1x1x128xf32>
    %31 = vector.shape_cast %30 : vector<1x1x128xf32> to vector<1x128xf32>
    %32 = vector.broadcast %3 : f32 to vector<1x128xf32>
    %33 = arith.mulf %31, %32 : vector<1x128xf32>
    %c1_16 = arith.constant 1 : index
    %c0_17 = arith.constant 0 : index
    %c0_18 = arith.constant 0 : index
    %34 = vector.load %arg3[%c1_16, %c0_17, %c0_18] : memref<3x1x128xf32, #tpu.memory_space<vmem>>, vector<1x1x128xf32>
    %35 = vector.shape_cast %34 : vector<1x1x128xf32> to vector<1x128xf32>
    %36 = vector.broadcast %4 : f32 to vector<1x128xf32>
    %37 = arith.mulf %35, %36 : vector<1x128xf32>
    %38 = arith.addf %33, %37 : vector<1x128xf32>
    %c2_19 = arith.constant 2 : index
    %c0_20 = arith.constant 0 : index
    %c0_21 = arith.constant 0 : index
    %39 = vector.load %arg3[%c2_19, %c0_20, %c0_21] : memref<3x1x128xf32, #tpu.memory_space<vmem>>, vector<1x1x128xf32>
    %40 = vector.shape_cast %39 : vector<1x1x128xf32> to vector<1x128xf32>
    %41 = vector.broadcast %5 : f32 to vector<1x128xf32>
    %42 = arith.mulf %40, %41 : vector<1x128xf32>
    %43 = arith.addf %38, %42 : vector<1x128xf32>
    %44 = vector.broadcast %43 : vector<1x128xf32> to vector<8x128xf32>
    %45 = arith.addf %29, %44 : vector<8x128xf32>
    %cst_22 = arith.constant 0.000000e+00 : f32
    %46 = vector.broadcast %cst_22 : f32 to vector<8x128xf32>
    %47 = arith.maximumf %45, %46 : vector<8x128xf32>
    %48 = arith.truncf %47 : vector<8x128xf32> to vector<8x128xbf16>
    %c0_23 = arith.constant 0 : index
    %c0_24 = arith.constant 0 : index
    %c0_25 = arith.constant 0 : index
    %49 = vector.load %arg4[%c0_23, %c0_24, %c0_25] : memref<3x128x256xbf16, #tpu.memory_space<vmem>>, vector<1x128x256xbf16>
    %50 = vector.shape_cast %49 : vector<1x128x256xbf16> to vector<128x256xbf16>
    %cst_26 = arith.constant dense<0.000000e+00> : vector<8x256xf32>
    %51 = tpu.matmul %48, %50, %cst_26 {dimension_numbers = #tpu.dot_dimension_numbers<[1], [0], [0], [1], [0, 0, 1, 1], [], []>} : vector<8x128xbf16>, vector<128x256xbf16>, vector<8x256xf32> -> vector<8x256xf32>
    %52 = vector.broadcast %6 : f32 to vector<8x256xf32>
    %53 = arith.mulf %51, %52 : vector<8x256xf32>
    %c1_27 = arith.constant 1 : index
    %c0_28 = arith.constant 0 : index
    %c0_29 = arith.constant 0 : index
    %54 = vector.load %arg4[%c1_27, %c0_28, %c0_29] : memref<3x128x256xbf16, #tpu.memory_space<vmem>>, vector<1x128x256xbf16>
    %55 = vector.shape_cast %54 : vector<1x128x256xbf16> to vector<128x256xbf16>
    %cst_30 = arith.constant dense<0.000000e+00> : vector<8x256xf32>
    %56 = tpu.matmul %48, %55, %cst_30 {dimension_numbers = #tpu.dot_dimension_numbers<[1], [0], [0], [1], [0, 0, 1, 1], [], []>} : vector<8x128xbf16>, vector<128x256xbf16>, vector<8x256xf32> -> vector<8x256xf32>
    %57 = vector.broadcast %7 : f32 to vector<8x256xf32>
    %58 = arith.mulf %56, %57 : vector<8x256xf32>
    %59 = arith.addf %53, %58 : vector<8x256xf32>
    %c2_31 = arith.constant 2 : index
    %c0_32 = arith.constant 0 : index
    %c0_33 = arith.constant 0 : index
    %60 = vector.load %arg4[%c2_31, %c0_32, %c0_33] : memref<3x128x256xbf16, #tpu.memory_space<vmem>>, vector<1x128x256xbf16>
    %61 = vector.shape_cast %60 : vector<1x128x256xbf16> to vector<128x256xbf16>
    %cst_34 = arith.constant dense<0.000000e+00> : vector<8x256xf32>
    %62 = tpu.matmul %48, %61, %cst_34 {dimension_numbers = #tpu.dot_dimension_numbers<[1], [0], [0], [1], [0, 0, 1, 1], [], []>} : vector<8x128xbf16>, vector<128x256xbf16>, vector<8x256xf32> -> vector<8x256xf32>
    %63 = vector.broadcast %8 : f32 to vector<8x256xf32>
    %64 = arith.mulf %62, %63 : vector<8x256xf32>
    %65 = arith.addf %59, %64 : vector<8x256xf32>
    %c0_35 = arith.constant 0 : index
    %c0_36 = arith.constant 0 : index
    %c0_37 = arith.constant 0 : index
    %66 = vector.load %arg5[%c0_35, %c0_36, %c0_37] : memref<3x1x256xf32, #tpu.memory_space<vmem>>, vector<1x1x256xf32>
    %67 = vector.shape_cast %66 : vector<1x1x256xf32> to vector<1x256xf32>
    %68 = vector.broadcast %9 : f32 to vector<1x256xf32>
    %69 = arith.mulf %67, %68 : vector<1x256xf32>
    %c1_38 = arith.constant 1 : index
    %c0_39 = arith.constant 0 : index
    %c0_40 = arith.constant 0 : index
    %70 = vector.load %arg5[%c1_38, %c0_39, %c0_40] : memref<3x1x256xf32, #tpu.memory_space<vmem>>, vector<1x1x256xf32>
    %71 = vector.shape_cast %70 : vector<1x1x256xf32> to vector<1x256xf32>
    %72 = vector.broadcast %10 : f32 to vector<1x256xf32>
    %73 = arith.mulf %71, %72 : vector<1x256xf32>
    %74 = arith.addf %69, %73 : vector<1x256xf32>
    %c2_41 = arith.constant 2 : index
    %c0_42 = arith.constant 0 : index
    %c0_43 = arith.constant 0 : index
    %75 = vector.load %arg5[%c2_41, %c0_42, %c0_43] : memref<3x1x256xf32, #tpu.memory_space<vmem>>, vector<1x1x256xf32>
    %76 = vector.shape_cast %75 : vector<1x1x256xf32> to vector<1x256xf32>
    %77 = vector.broadcast %11 : f32 to vector<1x256xf32>
    %78 = arith.mulf %76, %77 : vector<1x256xf32>
    %79 = arith.addf %74, %78 : vector<1x256xf32>
    %80 = vector.broadcast %79 : vector<1x256xf32> to vector<8x256xf32>
    %81 = arith.addf %65, %80 : vector<8x256xf32>
    %c0_44 = arith.constant 0 : index
    %c0_45 = arith.constant 0 : index
    %82 = vector.load %arg6[%c0_44, %c0_45] : memref<1x256xf32, #tpu.memory_space<vmem>>, vector<1x256xf32>
    %83 = vector.broadcast %82 : vector<1x256xf32> to vector<8x256xf32>
    %84 = arith.addf %81, %83 : vector<8x256xf32>
    %c0_46 = arith.constant 0 : index
    %c0_47 = arith.constant 0 : index
    %85 = vector.load %arg7[%c0_46, %c0_47] : memref<8x256xf32, #tpu.memory_space<vmem>>, vector<8x256xf32>
    tpu.vector_store %arg7[%c0_46, %c0_47], %84 {strides = array<i32>} : memref<8x256xf32, #tpu.memory_space<vmem>>, vector<8x256xf32>,
    return
  }
}

</mosaic_0001>

<llo_original>
// kernel: _forward_impl.1
$region0: #{_forward_impl.1}
  #allocation0 [shape = 'u32[]', space=smem, size = 0x4, offset = 0x4, fixed_abs, tag = 'smem constant byte address 0x4 - core index']
  #allocation1 [shape = 'u32[144,128]{1,0:T(1,128)}', space=vmem, size = 0x12000, scoped, tag = 'internal scratch']
  %s0 = inlined_call_operand.vmem [shape: f32[12], index: 0, kind: input, shape index: {}]
  %s1 = inlined_call_operand.vmem [shape: bf16[8,1024], index: 1, kind: input, shape index: {}]
  %s2 = inlined_call_operand.hbm [shape: bf16[3,1024,128], index: 2, kind: input, shape index: {}]
  %s3 = inlined_call_operand.vmem [shape: f32[3,1,128], index: 3, kind: input, shape index: {}]
  %s4 = inlined_call_operand.hbm [shape: bf16[3,128,256], index: 4, kind: input, shape index: {}]
  %s5 = inlined_call_operand.vmem [shape: f32[3,1,256], index: 5, kind: input, shape index: {}]
  %s6 = inlined_call_operand.vmem [shape: f32[1,256], index: 6, kind: input, shape index: {}]
  %s7 = inlined_call_operand.vmem [shape: f32[8,256], index: 7, kind: output, shape index: {}]
  %s8 = sld [smem:[#allocation0]]
  $region50: #{_forward_impl.1} parent=0
    _
  %s10 = ssub.s32 1, %s8
  %s11 = scalar_select 0, %s10, %s8
  $region1: #{_forward_impl.1} parent=0
    #allocation2 [shape = 'u8[512]{0}', space=smem, size = 0x200, scoped, tag = 'input window, operand 0, single buffered']
    #allocation3 [shape = 's32[1]{0}', space=sflag, size = 0x4, scoped, tag = 'scoped memory for _forward_impl.1']
    #allocation4 [shape = 's32[1]{0}', space=sflag, size = 0x4, scoped, tag = 'scoped memory for _forward_impl.1']
    #allocation5 [shape = 'u8[786432]{0}', space=vmem, size = 0xc0000, scoped, tag = 'input window, operand 2, single buffered']
    #allocation6 [shape = 'u8[196608]{0}', space=vmem, size = 0x30000, scoped, tag = 'input window, operand 4, single buffered']
    #allocation7 [shape = 's32[1]{0}', space=sflag, size = 0x4, scoped, tag = 'scoped memory for _forward_impl.1']
    %12 = vsyncpa [#allocation4], 0
    %13 = vsyncpa [#allocation3], 0
    %14 = vsyncpa [#allocation7], 0
    // Predicated region
    $region2: #{_forward_impl.1} parent=1 // pred_check
      _
    $region3: #{_forward_impl.1} parent=1 // pred_check_branch
      %16 = sbr.rel (0) target = $region5
    $region4: #{_forward_impl.1} parent=1 // pred_region
      %s18 = ssub.s32 16, 16
      %19 = vsyncadd [#allocation4], %s18
      %s21 = sshll.u32 %s0, 4
      %s22 = int_to_ptr.vmem [resolvable:$true] %s21
      %24 = dma.vmem_to_smem %s22, 16, [#allocation2], [#allocation4]
    $region5: #{_forward_impl.1} parent=1 // pred_fallthru
      _
    // Predicated region
    $region6: #{_forward_impl.1} parent=1 // pred_check
      _
    $region7: #{_forward_impl.1} parent=1 // pred_check_branch
      %26 = sbr.rel (0) target = $region9
    $region8: #{_forward_impl.1} parent=1 // pred_region
      _
    $region9: #{_forward_impl.1} parent=1 // pred_fallthru
      _
    // Predicated region
    $region10: #{_forward_impl.1} parent=1 // pred_check
      _
    $region11: #{_forward_impl.1} parent=1 // pred_check_branch
      %28 = sbr.rel (0) target = $region13
    $region12: #{_forward_impl.1} parent=1 // pred_region
      %s30 = ssub.s32 24576, 24576
      %31 = vsyncadd [#allocation3], %s30
      %s32 = sshll.u32 [#allocation5], 4
      %s33 = int_to_ptr.vmem [resolvable:$true] %s32
      %38 = dma.hbm_to_vmem [thread:$0]  %s2, 24576, %s33, [#allocation3], 64, 64, 4
    $region13: #{_forward_impl.1} parent=1 // pred_fallthru
      _
    // Predicated region
    $region14: #{_forward_impl.1} parent=1 // pred_check
      _
    $region15: #{_forward_impl.1} parent=1 // pred_check_branch
      %40 = sbr.rel (0) target = $region17
    $region16: #{_forward_impl.1} parent=1 // pred_region
      _
    $region17: #{_forward_impl.1} parent=1 // pred_fallthru
      _
    // Predicated region
    $region18: #{_forward_impl.1} parent=1 // pred_check
      _
    $region19: #{_forward_impl.1} parent=1 // pred_check_branch
      %42 = sbr.rel (0) target = $region21
    $region20: #{_forward_impl.1} parent=1 // pred_region
      %s44 = ssub.s32 6144, 6144
      %45 = vsyncadd [#allocation7], %s44
      %s46 = sshll.u32 [#allocation6], 4
      %s47 = int_to_ptr.vmem [resolvable:$true] %s46
      %52 = dma.hbm_to_vmem [thread:$0]  %s4, 6144, %s47, [#allocation7], 128, 128, 8
    $region21: #{_forward_impl.1} parent=1 // pred_fallthru
      _
    // Predicated region
    $region22: #{_forward_impl.1} parent=1 // pred_check
      _
    $region23: #{_forward_impl.1} parent=1 // pred_check_branch
      %54 = sbr.rel (0) target = $region25
    $region24: #{_forward_impl.1} parent=1 // pred_region
      _
    $region25: #{_forward_impl.1} parent=1 // pred_fallthru
      _
    // Predicated region
    $region26: #{_forward_impl.1} parent=1 // pred_check
      _
    $region27: #{_forward_impl.1} parent=1 // pred_check_branch
      %56 = sbr.rel (0) target = $region29
    $region28: #{_forward_impl.1} parent=1 // pred_region
      _
    $region29: #{_forward_impl.1} parent=1 // pred_fallthru
      _
    // Predicated region
    $region30: #{_forward_impl.1} parent=1 // pred_check
      _
    $region31: #{_forward_impl.1} parent=1 // pred_check_branch
      %58 = sbr.rel (0) target = $region33
    $region32: #{_forward_impl.1} parent=1 // pred_region
      %59 = dma.done [#allocation4], 16
    $region33: #{_forward_impl.1} parent=1 // pred_fallthru
      _
    // Predicated region
    $region34: #{_forward_impl.1} parent=1 // pred_check
      _
    $region35: #{_forward_impl.1} parent=1 // pred_check_branch
      %61 = sbr.rel (0) target = $region37
    $region36: #{_forward_impl.1} parent=1 // pred_region
      %62 = dma.done [#allocation3], 24576
    $region37: #{_forward_impl.1} parent=1 // pred_fallthru
      _
    // Predicated region
    $region38: #{_forward_impl.1} parent=1 // pred_check
      _
    $region39: #{_forward_impl.1} parent=1 // pred_check_branch
      %64 = sbr.rel (0) target = $region41
    $region40: #{_forward_impl.1} parent=1 // pred_region
      %65 = dma.done [#allocation7], 6144
    $region41: #{_forward_impl.1} parent=1 // pred_fallthru
      _
    %66 = sfence
    %s68 = sld [smem:[#allocation2]]
    %s69 = sld [smem:[#allocation2 + $0x1]]
    %s70 = sld [smem:[#allocation2 + $0x2]]
    %s71 = sld [smem:[#allocation2 + $0x3]]
    %s72 = sld [smem:[#allocation2 + $0x4]]
    %s73 = sld [smem:[#allocation2 + $0x5]]
    %s74 = sld [smem:[#allocation2 + $0x6]]
    %s75 = sld [smem:[#allocation2 + $0x7]]
    %s76 = sld [smem:[#allocation2 + $0x8]]
    %s77 = sld [smem:[#allocation2 + $0x9]]
    %s78 = sld [smem:[#allocation2 + $0xa]]
    %s79 = sld [smem:[#allocation2 + $0xb]]
    %v80 = vld [vmem:[%s1] sm:$0xff]
    %v81 = vld [vmem:[%s1 + $0x8] sm:$0xff]
    %v82 = vld [vmem:[%s1 + $0x10] sm:$0xff]
    %v83 = vld [vmem:[%s1 + $0x18] sm:$0xff]
    %v84 = vld [vmem:[#allocation5] sm:$0xf]
    %v85 = vld [vmem:[#allocation5 + $0x4] sm:$0xf]
    %v86 = vld [vmem:[#allocation5 + $0x8] sm:$0xf]
    %v87 = vld [vmem:[#allocation5 + $0xc] sm:$0xf]
    %v88 = vld [vmem:[#allocation5 + $0x10] sm:$0xf]
    %v89 = vld [vmem:[#allocation5 + $0x14] sm:$0xf]
    %v90 = vld [vmem:[#allocation5 + $0x18] sm:$0xf]
    %v91 = vld [vmem:[#allocation5 + $0x1c] sm:$0xf]
    %v92 = vld [vmem:[#allocation5 + $0x20] sm:$0xf]
    %v93 = vld [vmem:[#allocation5 + $0x24] sm:$0xf]
    %v94 = vld [vmem:[#allocation5 + $0x28] sm:$0xf]
    %v95 = vld [vmem:[#allocation5 + $0x2c] sm:$0xf]
    %v96 = vld [vmem:[#allocation5 + $0x30] sm:$0xf]
    %v97 = vld [vmem:[#allocation5 + $0x34] sm:$0xf]
    %v98 = vld [vmem:[#allocation5 + $0x38] sm:$0xf]
    %v99 = vld [vmem:[#allocation5 + $0x3c] sm:$0xf]
    %v100 = vld [vmem:[#allocation5 + $0x40] sm:$0xf]
    %v101 = vld [vmem:[#allocation5 + $0x44] sm:$0xf]
    %v102 = vld [vmem:[#allocation5 + $0x48] sm:$0xf]
    %v103 = vld [vmem:[#allocation5 + $0x4c] sm:$0xf]
    %v104 = vld [vmem:[#allocation5 + $0x50] sm:$0xf]
    %v105 = vld [vmem:[#allocation5 + $0x54] sm:$0xf]
    %v106 = vld [vmem:[#allocation5 + $0x58] sm:$0xf]
    %v107 = vld [vmem:[#allocation5 + $0x5c] sm:$0xf]
    %v108 = vld [vmem:[#allocation5 + $0x60] sm:$0xf]
    %v109 = vld [vmem:[#allocation5 + $0x64] sm:$0xf]
    %v110 = vld [vmem:[#allocation5 + $0x68] sm:$0xf]
    %v111 = vld [vmem:[#allocation5 + $0x6c] sm:$0xf]
    %v112 = vld [vmem:[#allocation5 + $0x70] sm:$0xf]
    %v113 = vld [vmem:[#allocation5 + $0x74] sm:$0xf]
    %v114 = vld [vmem:[#allocation5 + $0x78] sm:$0xf]
    %v115 = vld [vmem:[#allocation5 + $0x7c] sm:$0xf]
    %v116 = vld [vmem:[#allocation5 + $0x80] sm:$0xf]
    %v117 = vld [vmem:[#allocation5 + $0x84] sm:$0xf]
    %v118 = vld [vmem:[#allocation5 + $0x88] sm:$0xf]
    %v119 = vld [vmem:[#allocation5 + $0x8c] sm:$0xf]
    %v120 = vld [vmem:[#allocation5 + $0x90] sm:$0xf]
    %v121 = vld [vmem:[#allocation5 + $0x94] sm:$0xf]
    %v122 = vld [vmem:[#allocation5 + $0x98] sm:$0xf]
    %v123 = vld [vmem:[#allocation5 + $0x9c] sm:$0xf]
    %v124 = vld [vmem:[#allocation5 + $0xa0] sm:$0xf]
    %v125 = vld [vmem:[#allocation5 + $0xa4] sm:$0xf]
    %v126 = vld [vmem:[#allocation5 + $0xa8] sm:$0xf]
    %v127 = vld [vmem:[#allocation5 + $0xac] sm:$0xf]
    %v128 = vld [vmem:[#allocation5 + $0xb0] sm:$0xf]
    %v129 = vld [vmem:[#allocation5 + $0xb4] sm:$0xf]
    %v130 = vld [vmem:[#allocation5 + $0xb8] sm:$0xf]
    %v131 = vld [vmem:[#allocation5 + $0xbc] sm:$0xf]
    %v132 = vld [vmem:[#allocation5 + $0xc0] sm:$0xf]
    %v133 = vld [vmem:[#allocation5 + $0xc4] sm:$0xf]
    %v134 = vld [vmem:[#allocation5 + $0xc8] sm:$0xf]
    %v135 = vld [vmem:[#allocation5 + $0xcc] sm:$0xf]
    %v136 = vld [vmem:[#allocation5 + $0xd0] sm:$0xf]
    %v137 = vld [vmem:[#allocation5 + $0xd4] sm:$0xf]
    %v138 = vld [vmem:[#allocation5 + $0xd8] sm:$0xf]
    %v139 = vld [vmem:[#allocation5 + $0xdc] sm:$0xf]
    %v140 = vld [vmem:[#allocation5 + $0xe0] sm:$0xf]
    %v141 = vld [vmem:[#allocation5 + $0xe4] sm:$0xf]
    %v142 = vld [vmem:[#allocation5 + $0xe8] sm:$0xf]
    %v143 = vld [vmem:[#allocation5 + $0xec] sm:$0xf]
    %v144 = vld [vmem:[#allocation5 + $0xf0] sm:$0xf]
    %v145 = vld [vmem:[#allocation5 + $0xf4] sm:$0xf]
    %v146 = vld [vmem:[#allocation5 + $0xf8] sm:$0xf]
    %v147 = vld [vmem:[#allocation5 + $0xfc] sm:$0xf]
    %v148 = vld [vmem:[#allocation5 + $0x100] sm:$0xf]
    %v149 = vld [vmem:[#allocation5 + $0x104] sm:$0xf]
    %v150 = vld [vmem:[#allocation5 + $0x108] sm:$0xf]
    %v151 = vld [vmem:[#allocation5 + $0x10c] sm:$0xf]
    %v152 = vld [vmem:[#allocation5 + $0x110] sm:$0xf]
    %v153 = vld [vmem:[#allocation5 + $0x114] sm:$0xf]
    %v154 = vld [vmem:[#allocation5 + $0x118] sm:$0xf]
    %v155 = vld [vmem:[#allocation5 + $0x11c] sm:$0xf]
    %v156 = vld [vmem:[#allocation5 + $0x120] sm:$0xf]
    %v157 = vld [vmem:[#allocation5 + $0x124] sm:$0xf]
    %v158 = vld [vmem:[#allocation5 + $0x128] sm:$0xf]
    %v159 = vld [vmem:[#allocation5 + $0x12c] sm:$0xf]
    %v160 = vld [vmem:[#allocation5 + $0x130] sm:$0xf]
    %v161 = vld [vmem:[#allocation5 + $0x134] sm:$0xf]
    %v162 = vld [vmem:[#allocation5 + $0x138] sm:$0xf]
    %v163 = vld [vmem:[#allocation5 + $0x13c] sm:$0xf]
    %v164 = vld [vmem:[#allocation5 + $0x140] sm:$0xf]
    %v165 = vld [vmem:[#allocation5 + $0x144] sm:$0xf]
    %v166 = vld [vmem:[#allocation5 + $0x148] sm:$0xf]
    %v167 = vld [vmem:[#allocation5 + $0x14c] sm:$0xf]
    %v168 = vld [vmem:[#allocation5 + $0x150] sm:$0xf]
    %v169 = vld [vmem:[#allocation5 + $0x154] sm:$0xf]
    %v170 = vld [vmem:[#allocation5 + $0x158] sm:$0xf]
    %v171 = vld [vmem:[#allocation5 + $0x15c] sm:$0xf]
    %v172 = vld [vmem:[#allocation5 + $0x160] sm:$0xf]
    %v173 = vld [vmem:[#allocation5 + $0x164] sm:$0xf]
    %v174 = vld [vmem:[#allocation5 + $0x168] sm:$0xf]
    %v175 = vld [vmem:[#allocation5 + $0x16c] sm:$0xf]
    %v176 = vld [vmem:[#allocation5 + $0x170] sm:$0xf]
    %v177 = vld [vmem:[#allocation5 + $0x174] sm:$0xf]
    %v178 = vld [vmem:[#allocation5 + $0x178] sm:$0xf]
    %v179 = vld [vmem:[#allocation5 + $0x17c] sm:$0xf]
    %v180 = vld [vmem:[#allocation5 + $0x180] sm:$0xf]
    %v181 = vld [vmem:[#allocation5 + $0x184] sm:$0xf]
    %v182 = vld [vmem:[#allocation5 + $0x188] sm:$0xf]
    %v183 = vld [vmem:[#allocation5 + $0x18c] sm:$0xf]
    %v184 = vld [vmem:[#allocation5 + $0x190] sm:$0xf]
    %v185 = vld [vmem:[#allocation5 + $0x194] sm:$0xf]
    %v186 = vld [vmem:[#allocation5 + $0x198] sm:$0xf]
    %v187 = vld [vmem:[#allocation5 + $0x19c] sm:$0xf]
    %v188 = vld [vmem:[#allocation5 + $0x1a0] sm:$0xf]
    %v189 = vld [vmem:[#allocation5 + $0x1a4] sm:$0xf]
    %v190 = vld [vmem:[#allocation5 + $0x1a8] sm:$0xf]
    %v191 = vld [vmem:[#allocation5 + $0x1ac] sm:$0xf]
    %v192 = vld [vmem:[#allocation5 + $0x1b0] sm:$0xf]
    %v193 = vld [vmem:[#allocation5 + $0x1b4] sm:$0xf]
    %v194 = vld [vmem:[#allocation5 + $0x1b8] sm:$0xf]
    %v195 = vld [vmem:[#allocation5 + $0x1bc] sm:$0xf]
    %v196 = vld [vmem:[#allocation5 + $0x1c0] sm:$0xf]
    %v197 = vld [vmem:[#allocation5 + $0x1c4] sm:$0xf]
    %v198 = vld [vmem:[#allocation5 + $0x1c8] sm:$0xf]
    %v199 = vld [vmem:[#allocation5 + $0x1cc] sm:$0xf]
    %v200 = vld [vmem:[#allocation5 + $0x1d0] sm:$0xf]
    %v201 = vld [vmem:[#allocation5 + $0x1d4] sm:$0xf]
    %v202 = vld [vmem:[#allocation5 + $0x1d8] sm:$0xf]
    %v203 = vld [vmem:[#allocation5 + $0x1dc] sm:$0xf]
    %v204 = vld [vmem:[#allocation5 + $0x1e0] sm:$0xf]
    %v205 = vld [vmem:[#allocation5 + $0x1e4] sm:$0xf]
    %v206 = vld [vmem:[#allocation5 + $0x1e8] sm:$0xf]
    %v207 = vld [vmem:[#allocation5 + $0x1ec] sm:$0xf]
    %v208 = vld [vmem:[#allocation5 + $0x1f0] sm:$0xf]
    %v209 = vld [vmem:[#allocation5 + $0x1f4] sm:$0xf]
    %v210 = vld [vmem:[#allocation5 + $0x1f8] sm:$0xf]
    %v211 = vld [vmem:[#allocation5 + $0x1fc] sm:$0xf]
    %v216 = vunpack.c.l.b16 %v80
    %v217 = vunpack.c.h.b16 %v80
    %v218 = vunpack.c.l.b16 %v81
    %v219 = vunpack.c.h.b16 %v81
    %v220 = vunpack.c.l.b16 %v82
    %v221 = vunpack.c.h.b16 %v82
    %v222 = vunpack.c.l.b16 %v83
    %v223 = vunpack.c.h.b16 %v83
    %v224 = vpack.c.b16 %v216, %v216
    %v225 = vpack.c.b16 %v217, %v217
    %v226 = vpack.c.b16 %v218, %v218
    %v227 = vpack.c.b16 %v219, %v219
    %v228 = vpack.c.b16 %v220, %v220
    %v229 = vpack.c.b16 %v221, %v221
    %v230 = vpack.c.b16 %v222, %v222
    %v231 = vpack.c.b16 %v223, %v223
    %v368 = vunpack.c.l.b16 %v84
    %v369 = vunpack.c.l.b16 %v85
    %v370 = vunpack.c.l.b16 %v86
    %v371 = vunpack.c.l.b16 %v87
    %v372 = vunpack.c.l.b16 %v88
    %v373 = vunpack.c.l.b16 %v89
    %v374 = vunpack.c.l.b16 %v90
    %v375 = vunpack.c.l.b16 %v91
    %v376 = vunpack.c.l.b16 %v92
    %v377 = vunpack.c.l.b16 %v93
    %v378 = vunpack.c.l.b16 %v94
    %v379 = vunpack.c.l.b16 %v95
    %v380 = vunpack.c.l.b16 %v96
    %v381 = vunpack.c.l.b16 %v97
    %v382 = vunpack.c.l.b16 %v98
    %v383 = vunpack.c.l.b16 %v99
    %v384 = vunpack.c.l.b16 %v100
    %v385 = vunpack.c.l.b16 %v101
    %v386 = vunpack.c.l.b16 %v102
    %v387 = vunpack.c.l.b16 %v103
    %v388 = vunpack.c.l.b16 %v104
    %v389 = vunpack.c.l.b16 %v105
    %v390 = vunpack.c.l.b16 %v106
    %v391 = vunpack.c.l.b16 %v107
    %v392 = vunpack.c.l.b16 %v108
    %v393 = vunpack.c.l.b16 %v109
    %v394 = vunpack.c.l.b16 %v110
    %v395 = vunpack.c.l.b16 %v111
    %v396 = vunpack.c.l.b16 %v112
    %v397 = vunpack.c.l.b16 %v113
    %v398 = vunpack.c.l.b16 %v114
    %v399 = vunpack.c.l.b16 %v115
    %v400 = vunpack.c.l.b16 %v116
    %v401 = vunpack.c.l.b16 %v117
    %v402 = vunpack.c.l.b16 %v118
    %v403 = vunpack.c.l.b16 %v119
    %v404 = vunpack.c.l.b16 %v120
    %v405 = vunpack.c.l.b16 %v121
    %v406 = vunpack.c.l.b16 %v122
    %v407 = vunpack.c.l.b16 %v123
    %v408 = vunpack.c.l.b16 %v124
    %v409 = vunpack.c.l.b16 %v125
    %v410 = vunpack.c.l.b16 %v126
    %v411 = vunpack.c.l.b16 %v127
    %v412 = vunpack.c.l.b16 %v128
    %v413 = vunpack.c.l.b16 %v129
    %v414 = vunpack.c.l.b16 %v130
    %v415 = vunpack.c.l.b16 %v131
    %v416 = vunpack.c.l.b16 %v132
    %v417 = vunpack.c.l.b16 %v133
    %v418 = vunpack.c.l.b16 %v134
    %v419 = vunpack.c.l.b16 %v135
    %v420 = vunpack.c.l.b16 %v136
    %v421 = vunpack.c.l.b16 %v137
    %v422 = vunpack.c.l.b16 %v138
    %v423 = vunpack.c.l.b16 %v139
    %v424 = vunpack.c.l.b16 %v140
    %v425 = vunpack.c.l.b16 %v141
    %v426 = vunpack.c.l.b16 %v142
    %v427 = vunpack.c.l.b16 %v143
    %v428 = vunpack.c.l.b16 %v144
    %v429 = vunpack.c.l.b16 %v145
    %v430 = vunpack.c.l.b16 %v146
    %v431 = vunpack.c.l.b16 %v147
    %v432 = vunpack.c.l.b16 %v148
    %v433 = vunpack.c.l.b16 %v149
    %v434 = vunpack.c.l.b16 %v150
    %v435 = vunpack.c.l.b16 %v151
    %v436 = vunpack.c.l.b16 %v152
    %v437 = vunpack.c.l.b16 %v153
    %v438 = vunpack.c.l.b16 %v154
    %v439 = vunpack.c.l.b16 %v155
    %v440 = vunpack.c.l.b16 %v156
    %v441 = vunpack.c.l.b16 %v157
    %v442 = vunpack.c.l.b16 %v158
    %v443 = vunpack.c.l.b16 %v159
    %v444 = vunpack.c.l.b16 %v160
    %v445 = vunpack.c.l.b16 %v161
    %v446 = vunpack.c.l.b16 %v162
    %v447 = vunpack.c.l.b16 %v163
    %v448 = vunpack.c.l.b16 %v164
    %v449 = vunpack.c.l.b16 %v165
    %v450 = vunpack.c.l.b16 %v166
    %v451 = vunpack.c.l.b16 %v167
    %v452 = vunpack.c.l.b16 %v168
    %v453 = vunpack.c.l.b16 %v169
    %v454 = vunpack.c.l.b16 %v170
    %v455 = vunpack.c.l.b16 %v171
    %v456 = vunpack.c.l.b16 %v172
    %v457 = vunpack.c.l.b16 %v173
    %v458 = vunpack.c.l.b16 %v174
    %v459 = vunpack.c.l.b16 %v175
    %v460 = vunpack.c.l.b16 %v176
    %v461 = vunpack.c.l.b16 %v177
    %v462 = vunpack.c.l.b16 %v178
    %v463 = vunpack.c.l.b16 %v179
    %v464 = vunpack.c.l.b16 %v180
    %v465 = vunpack.c.l.b16 %v181
    %v466 = vunpack.c.l.b16 %v182
    %v467 = vunpack.c.l.b16 %v183
    %v468 = vunpack.c.l.b16 %v184
    %v469 = vunpack.c.l.b16 %v185
    %v470 = vunpack.c.l.b16 %v186
    %v471 = vunpack.c.l.b16 %v187
    %v472 = vunpack.c.l.b16 %v188
    %v473 = vunpack.c.l.b16 %v189
    %v474 = vunpack.c.l.b16 %v190
    %v475 = vunpack.c.l.b16 %v191
    %v476 = vunpack.c.l.b16 %v192
    %v477 = vunpack.c.l.b16 %v193
    %v478 = vunpack.c.l.b16 %v194
    %v479 = vunpack.c.l.b16 %v195
    %v480 = vunpack.c.l.b16 %v196
    %v481 = vunpack.c.l.b16 %v197
    %v482 = vunpack.c.l.b16 %v198
    %v483 = vunpack.c.l.b16 %v199
    %v484 = vunpack.c.l.b16 %v200
    %v485 = vunpack.c.l.b16 %v201
    %v486 = vunpack.c.l.b16 %v202
    %v487 = vunpack.c.l.b16 %v203
    %v488 = vunpack.c.l.b16 %v204
    %v489 = vunpack.c.l.b16 %v205
    %v490 = vunpack.c.l.b16 %v206
    %v491 = vunpack.c.l.b16 %v207
    %v492 = vunpack.c.l.b16 %v208
    %v493 = vunpack.c.l.b16 %v209
    %v494 = vunpack.c.l.b16 %v210
    %v495 = vunpack.c.l.b16 %v211
    %v496 = vpack.c.b16 %v369, %v368
    %v497 = vpack.c.b16 %v371, %v370
    %v498 = vpack.c.b16 %v373, %v372
    %v499 = vpack.c.b16 %v375, %v374
    %v500 = vpack.c.b16 %v377, %v376
    %v501 = vpack.c.b16 %v379, %v378
    %v502 = vpack.c.b16 %v381, %v380
    %v503 = vpack.c.b16 %v383, %v382
    %v504 = vpack.c.b16 %v385, %v384
    %v505 = vpack.c.b16 %v387, %v386
    %v506 = vpack.c.b16 %v389, %v388
    %v507 = vpack.c.b16 %v391, %v390
    %v508 = vpack.c.b16 %v393, %v392
    %v509 = vpack.c.b16 %v395, %v394
    %v510 = vpack.c.b16 %v397, %v396
    %v511 = vpack.c.b16 %v399, %v398
    %v512 = vpack.c.b16 %v401, %v400
    %v513 = vpack.c.b16 %v403, %v402
    %v514 = vpack.c.b16 %v405, %v404
    %v515 = vpack.c.b16 %v407, %v406
    %v516 = vpack.c.b16 %v409, %v408
    %v517 = vpack.c.b16 %v411, %v410
    %v518 = vpack.c.b16 %v413, %v412
    %v519 = vpack.c.b16 %v415, %v414
    %v520 = vpack.c.b16 %v417, %v416
    %v521 = vpack.c.b16 %v419, %v418
    %v522 = vpack.c.b16 %v421, %v420
    %v523 = vpack.c.b16 %v423, %v422
    %v524 = vpack.c.b16 %v425, %v424
    %v525 = vpack.c.b16 %v427, %v426
    %v526 = vpack.c.b16 %v429, %v428
    %v527 = vpack.c.b16 %v431, %v430
    %v528 = vpack.c.b16 %v433, %v432
    %v529 = vpack.c.b16 %v435, %v434
    %v530 = vpack.c.b16 %v437, %v436
    %v531 = vpack.c.b16 %v439, %v438
    %v532 = vpack.c.b16 %v441, %v440
    %v533 = vpack.c.b16 %v443, %v442
    %v534 = vpack.c.b16 %v445, %v444
    %v535 = vpack.c.b16 %v447, %v446
    %v536 = vpack.c.b16 %v449, %v448
    %v537 = vpack.c.b16 %v451, %v450
    %v538 = vpack.c.b16 %v453, %v452
    %v539 = vpack.c.b16 %v455, %v454
    %v540 = vpack.c.b16 %v457, %v456
    %v541 = vpack.c.b16 %v459, %v458
    %v542 = vpack.c.b16 %v461, %v460
    %v543 = vpack.c.b16 %v463, %v462
    %v544 = vpack.c.b16 %v465, %v464
    %v545 = vpack.c.b16 %v467, %v466
    %v546 = vpack.c.b16 %v469, %v468
    %v547 = vpack.c.b16 %v471, %v470
    %v548 = vpack.c.b16 %v473, %v472
    %v549 = vpack.c.b16 %v475, %v474
    %v550 = vpack.c.b16 %v477, %v476
    %v551 = vpack.c.b16 %v479, %v478
    %v552 = vpack.c.b16 %v481, %v480
    %v553 = vpack.c.b16 %v483, %v482
    %v554 = vpack.c.b16 %v485, %v484
    %v555 = vpack.c.b16 %v487, %v486
    %v556 = vpack.c.b16 %v489, %v488
    %v557 = vpack.c.b16 %v491, %v490
    %v558 = vpack.c.b16 %v493, %v492
    %v559 = vpack.c.b16 %v495, %v494
    %624 = vmatprep.subr.bf16.mxu0 0
    %625 = vmatpush1.bf16.msra.mxu0 %v496
    %626 = vmatprep.subr.bf16.mxu0 0
    %627 = vmatpush1.bf16.msra.mxu0 %v497
    %628 = vmatprep.subr.bf16.mxu0 0
    %629 = vmatpush1.bf16.msra.mxu0 %v498
    %630 = vmatprep.subr.bf16.mxu0 0
    %631 = vmatpush1.bf16.msra.mxu0 %v499
    %632 = vmatprep.subr.bf16.mxu0 0
    %633 = vmatpush1.bf16.msra.mxu0 %v500
    %634 = vmatprep.subr.bf16.mxu0 0
    %635 = vmatpush1.bf16.msra.mxu0 %v501
    %636 = vmatprep.subr.bf16.mxu0 0
    %637 = vmatpush1.bf16.msra.mxu0 %v502
    %638 = vmatprep.subr.bf16.mxu0 0
    %639 = vmatpush1.bf16.msra.mxu0 %v503
    %640 = vmatprep.subr.bf16.mxu0 0
    %641 = vmatpush1.bf16.msra.mxu0 %v504
    %642 = vmatprep.subr.bf16.mxu0 0
    %643 = vmatpush1.bf16.msra.mxu0 %v505
    %644 = vmatprep.subr.bf16.mxu0 0
    %645 = vmatpush1.bf16.msra.mxu0 %v506
    %646 = vmatprep.subr.bf16.mxu0 0
    %647 = vmatpush1.bf16.msra.mxu0 %v507
    %648 = vmatprep.subr.bf16.mxu0 0
    %649 = vmatpush1.bf16.msra.mxu0 %v508
    %650 = vmatprep.subr.bf16.mxu0 0
    %651 = vmatpush1.bf16.msra.mxu0 %v509
    %652 = vmatprep.subr.bf16.mxu0 0
    %653 = vmatpush1.bf16.msra.mxu0 %v510
    %654 = vmatprep.subr.bf16.mxu0 0
    %655 = vmatpush1.bf16.msra.mxu0 %v511
    %656 = vmatprep.mubr.bf16.mxu0 %v225
    %657 = vmatmul.mubr.bf16.gmra.mrb[0].mxu0 %v224
    %v658 = vpop.f32.mrb[0].mxu0
    %v659 = vadd.f32 0.0, %v658
    %v660 = vpop.f32.mrb[0].mxu0
    %v661 = vpop.f32.mrb[0].mxu0
    %v662 = vpop.f32.mrb[0].mxu0
    %663 = vdwg.mxu0
    %664 = vmatprep.subr.bf16.mxu0 0
    %665 = vmatpush1.bf16.msra.mxu0 %v512
    %666 = vmatprep.subr.bf16.mxu0 0
    %667 = vmatpush1.bf16.msra.mxu0 %v513
    %668 = vmatprep.subr.bf16.mxu0 0
    %669 = vmatpush1.bf16.msra.mxu0 %v514
    %670 = vmatprep.subr.bf16.mxu0 0
    %671 = vmatpush1.bf16.msra.mxu0 %v515
    %672 = vmatprep.subr.bf16.mxu0 0
    %673 = vmatpush1.bf16.msra.mxu0 %v516
    %674 = vmatprep.subr.bf16.mxu0 0
    %675 = vmatpush1.bf16.msra.mxu0 %v517
    %676 = vmatprep.subr.bf16.mxu0 0
    %677 = vmatpush1.bf16.msra.mxu0 %v518
    %678 = vmatprep.subr.bf16.mxu0 0
    %679 = vmatpush1.bf16.msra.mxu0 %v519
    %680 = vmatprep.subr.bf16.mxu0 0
    %681 = vmatpush1.bf16.msra.mxu0 %v520
    %682 = vmatprep.subr.bf16.mxu0 0
    %683 = vmatpush1.bf16.msra.mxu0 %v521
    %684 = vmatprep.subr.bf16.mxu0 0
    %685 = vmatpush1.bf16.msra.mxu0 %v522
    %686 = vmatprep.subr.bf16.mxu0 0
    %687 = vmatpush1.bf16.msra.mxu0 %v523
    %688 = vmatprep.subr.bf16.mxu0 0
    %689 = vmatpush1.bf16.msra.mxu0 %v524
    %690 = vmatprep.subr.bf16.mxu0 0
    %691 = vmatpush1.bf16.msra.mxu0 %v525
    %692 = vmatprep.subr.bf16.mxu0 0
    %693 = vmatpush1.bf16.msra.mxu0 %v526
    %694 = vmatprep.subr.bf16.mxu0 0
    %695 = vmatpush1.bf16.msra.mxu0 %v527
    %696 = vmatprep.mubr.bf16.mxu0 %v227
    %697 = vmatmul.mubr.bf16.gmra.mrb[0].mxu0 %v226
    %v698 = vpop.f32.mrb[0].mxu0
    %v699 = vadd.f32 %v659, %v698
    %v700 = vpop.f32.mrb[0].mxu0
    %v701 = vpop.f32.mrb[0].mxu0
    %v702 = vpop.f32.mrb[0].mxu0
    %703 = vdwg.mxu0
    %704 = vmatprep.subr.bf16.mxu0 0
    %705 = vmatpush1.bf16.msra.mxu0 %v528
    %706 = vmatprep.subr.bf16.mxu0 0
    %707 = vmatpush1.bf16.msra.mxu0 %v529
    %708 = vmatprep.subr.bf16.mxu0 0
    %709 = vmatpush1.bf16.msra.mxu0 %v530
    %710 = vmatprep.subr.bf16.mxu0 0
    %711 = vmatpush1.bf16.msra.mxu0 %v531
    %712 = vmatprep.subr.bf16.mxu0 0
    %713 = vmatpush1.bf16.msra.mxu0 %v532
    %714 = vmatprep.subr.bf16.mxu0 0
    %715 = vmatpush1.bf16.msra.mxu0 %v533
    %716 = vmatprep.subr.bf16.mxu0 0
    %717 = vmatpush1.bf16.msra.mxu0 %v534
    %718 = vmatprep.subr.bf16.mxu0 0
    %719 = vmatpush1.bf16.msra.mxu0 %v535
    %720 = vmatprep.subr.bf16.mxu0 0
    %721 = vmatpush1.bf16.msra.mxu0 %v536
    %722 = vmatprep.subr.bf16.mxu0 0
    %723 = vmatpush1.bf16.msra.mxu0 %v537
    %724 = vmatprep.subr.bf16.mxu0 0
    %725 = vmatpush1.bf16.msra.mxu0 %v538
    %726 = vmatprep.subr.bf16.mxu0 0
    %727 = vmatpush1.bf16.msra.mxu0 %v539
    %728 = vmatprep.subr.bf16.mxu0 0
    %729 = vmatpush1.bf16.msra.mxu0 %v540
    %730 = vmatprep.subr.bf16.mxu0 0
    %731 = vmatpush1.bf16.msra.mxu0 %v541
    %732 = vmatprep.subr.bf16.mxu0 0
    %733 = vmatpush1.bf16.msra.mxu0 %v542
    %734 = vmatprep.subr.bf16.mxu0 0
    %735 = vmatpush1.bf16.msra.mxu0 %v543
    %736 = vmatprep.mubr.bf16.mxu0 %v229
    %737 = vmatmul.mubr.bf16.gmra.mrb[0].mxu0 %v228
    %v738 = vpop.f32.mrb[0].mxu0
    %v739 = vadd.f32 %v699, %v738
    %v740 = vpop.f32.mrb[0].mxu0
    %v741 = vpop.f32.mrb[0].mxu0
    %v742 = vpop.f32.mrb[0].mxu0
    %743 = vdwg.mxu0
    %744 = vmatprep.subr.bf16.mxu0 0
    %745 = vmatpush1.bf16.msra.mxu0 %v544
    %746 = vmatprep.subr.bf16.mxu0 0
    %747 = vmatpush1.bf16.msra.mxu0 %v545
    %748 = vmatprep.subr.bf16.mxu0 0
    %749 = vmatpush1.bf16.msra.mxu0 %v546
    %750 = vmatprep.subr.bf16.mxu0 0
    %751 = vmatpush1.bf16.msra.mxu0 %v547
    %752 = vmatprep.subr.bf16.mxu0 0
    %753 = vmatpush1.bf16.msra.mxu0 %v548
    %754 = vmatprep.subr.bf16.mxu0 0
    %755 = vmatpush1.bf16.msra.mxu0 %v549
    %756 = vmatprep.subr.bf16.mxu0 0
    %757 = vmatpush1.bf16.msra.mxu0 %v550
    %758 = vmatprep.subr.bf16.mxu0 0
    %759 = vmatpush1.bf16.msra.mxu0 %v551
    %760 = vmatprep.subr.bf16.mxu0 0
    %761 = vmatpush1.bf16.msra.mxu0 %v552
    %762 = vmatprep.subr.bf16.mxu0 0
    %763 = vmatpush1.bf16.msra.mxu0 %v553
    %764 = vmatprep.subr.bf16.mxu0 0
    %765 = vmatpush1.bf16.msra.mxu0 %v554
    %766 = vmatprep.subr.bf16.mxu0 0
    %767 = vmatpush1.bf16.msra.mxu0 %v555
    %768 = vmatprep.subr.bf16.mxu0 0
    %769 = vmatpush1.bf16.msra.mxu0 %v556
    %770 = vmatprep.subr.bf16.mxu0 0
    %771 = vmatpush1.bf16.msra.mxu0 %v557
    %772 = vmatprep.subr.bf16.mxu0 0
    %773 = vmatpush1.bf16.msra.mxu0 %v558
    %774 = vmatprep.subr.bf16.mxu0 0
    %775 = vmatpush1.bf16.msra.mxu0 %v559
    %776 = vmatprep.mubr.bf16.mxu0 %v231
    %777 = vmatmul.mubr.bf16.gmra.mrb[0].mxu0 %v230
    %v778 = vpop.f32.mrb[0].mxu0
    %v779 = vadd.f32 %v739, %v778
    %v780 = vpop.f32.mrb[0].mxu0
    %v781 = vpop.f32.mrb[0].mxu0
    %v782 = vpop.f32.mrb[0].mxu0
    %783 = vdwg.mxu0
    %v784 = vstv %s68
    %v785 = vmul.f32 %v779, %v784
    %s786 = scalar_lea.vmem [#allocation5], 512
    %v787 = vld [vmem:[%s786] sm:$0xf]
    %v788 = vld [vmem:[%s786 + $0x4] sm:$0xf]
    %v789 = vld [vmem:[%s786 + $0x8] sm:$0xf]
    %v790 = vld [vmem:[%s786 + $0xc] sm:$0xf]
    %v791 = vld [vmem:[%s786 + $0x10] sm:$0xf]
    %v792 = vld [vmem:[%s786 + $0x14] sm:$0xf]
    %v793 = vld [vmem:[%s786 + $0x18] sm:$0xf]
    %v794 = vld [vmem:[%s786 + $0x1c] sm:$0xf]
    %v795 = vld [vmem:[%s786 + $0x20] sm:$0xf]
    %v796 = vld [vmem:[%s786 + $0x24] sm:$0xf]
    %v797 = vld [vmem:[%s786 + $0x28] sm:$0xf]
    %v798 = vld [vmem:[%s786 + $0x2c] sm:$0xf]
    %v799 = vld [vmem:[%s786 + $0x30] sm:$0xf]
    %v800 = vld [vmem:[%s786 + $0x34] sm:$0xf]
    %v801 = vld [vmem:[%s786 + $0x38] sm:$0xf]
    %v802 = vld [vmem:[%s786 + $0x3c] sm:$0xf]
    %v803 = vld [vmem:[%s786 + $0x40] sm:$0xf]
    %v804 = vld [vmem:[%s786 + $0x44] sm:$0xf]
    %v805 = vld [vmem:[%s786 + $0x48] sm:$0xf]
    %v806 = vld [vmem:[%s786 + $0x4c] sm:$0xf]
    %v807 = vld [vmem:[%s786 + $0x50] sm:$0xf]
    %v808 = vld [vmem:[%s786 + $0x54] sm:$0xf]
    %v809 = vld [vmem:[%s786 + $0x58] sm:$0xf]
    %v810 = vld [vmem:[%s786 + $0x5c] sm:$0xf]
    %v811 = vld [vmem:[%s786 + $0x60] sm:$0xf]
    %v812 = vld [vmem:[%s786 + $0x64] sm:$0xf]
    %v813 = vld [vmem:[%s786 + $0x68] sm:$0xf]
    %v814 = vld [vmem:[%s786 + $0x6c] sm:$0xf]
    %v815 = vld [vmem:[%s786 + $0x70] sm:$0xf]
    %v816 = vld [vmem:[%s786 + $0x74] sm:$0xf]
    %v817 = vld [vmem:[%s786 + $0x78] sm:$0xf]
    %v818 = vld [vmem:[%s786 + $0x7c] sm:$0xf]
    %v819 = vld [vmem:[%s786 + $0x80] sm:$0xf]
    %v820 = vld [vmem:[%s786 + $0x84] sm:$0xf]
    %v821 = vld [vmem:[%s786 + $0x88] sm:$0xf]
    %v822 = vld [vmem:[%s786 + $0x8c] sm:$0xf]
    %v823 = vld [vmem:[%s786 + $0x90] sm:$0xf]
    %v824 = vld [vmem:[%s786 + $0x94] sm:$0xf]
    %v825 = vld [vmem:[%s786 + $0x98] sm:$0xf]
    %v826 = vld [vmem:[%s786 + $0x9c] sm:$0xf]
    %v827 = vld [vmem:[%s786 + $0xa0] sm:$0xf]
    %v828 = vld [vmem:[%s786 + $0xa4] sm:$0xf]
    %v829 = vld [vmem:[%s786 + $0xa8] sm:$0xf]
    %v830 = vld [vmem:[%s786 + $0xac] sm:$0xf]
    %v831 = vld [vmem:[%s786 + $0xb0] sm:$0xf]
    %v832 = vld [vmem:[%s786 + $0xb4] sm:$0xf]
    %v833 = vld [vmem:[%s786 + $0xb8] sm:$0xf]
    %v834 = vld [vmem:[%s786 + $0xbc] sm:$0xf]
    %v835 = vld [vmem:[%s786 + $0xc0] sm:$0xf]
    %v836 = vld [vmem:[%s786 + $0xc4] sm:$0xf]
    %v837 = vld [vmem:[%s786 + $0xc8] sm:$0xf]
    %v838 = vld [vmem:[%s786 + $0xcc] sm:$0xf]
    %v839 = vld [vmem:[%s786 + $0xd0] sm:$0xf]
    %v840 = vld [vmem:[%s786 + $0xd4] sm:$0xf]
    %v841 = vld [vmem:[%s786 + $0xd8] sm:$0xf]
    %v842 = vld [vmem:[%s786 + $0xdc] sm:$0xf]
    %v843 = vld [vmem:[%s786 + $0xe0] sm:$0xf]
    %v844 = vld [vmem:[%s786 + $0xe4] sm:$0xf]
    %v845 = vld [vmem:[%s786 + $0xe8] sm:$0xf]
    %v846 = vld [vmem:[%s786 + $0xec] sm:$0xf]
    %v847 = vld [vmem:[%s786 + $0xf0] sm:$0xf]
    %v848 = vld [vmem:[%s786 + $0xf4] sm:$0xf]
    %v849 = vld [vmem:[%s786 + $0xf8] sm:$0xf]
    %v850 = vld [vmem:[%s786 + $0xfc] sm:$0xf]
    %v851 = vld [vmem:[%s786 + $0x100] sm:$0xf]
    %v852 = vld [vmem:[%s786 + $0x104] sm:$0xf]
    %v853 = vld [vmem:[%s786 + $0x108] sm:$0xf]
    %v854 = vld [vmem:[%s786 + $0x10c] sm:$0xf]
    %v855 = vld [vmem:[%s786 + $0x110] sm:$0xf]
    %v856 = vld [vmem:[%s786 + $0x114] sm:$0xf]
    %v857 = vld [vmem:[%s786 + $0x118] sm:$0xf]
    %v858 = vld [vmem:[%s786 + $0x11c] sm:$0xf]
    %v859 = vld [vmem:[%s786 + $0x120] sm:$0xf]
    %v860 = vld [vmem:[%s786 + $0x124] sm:$0xf]
    %v861 = vld [vmem:[%s786 + $0x128] sm:$0xf]
    %v862 = vld [vmem:[%s786 + $0x12c] sm:$0xf]
    %v863 = vld [vmem:[%s786 + $0x130] sm:$0xf]
    %v864 = vld [vmem:[%s786 + $0x134] sm:$0xf]
    %v865 = vld [vmem:[%s786 + $0x138] sm:$0xf]
    %v866 = vld [vmem:[%s786 + $0x13c] sm:$0xf]
    %v867 = vld [vmem:[%s786 + $0x140] sm:$0xf]
    %v868 = vld [vmem:[%s786 + $0x144] sm:$0xf]
    %v869 = vld [vmem:[%s786 + $0x148] sm:$0xf]
    %v870 = vld [vmem:[%s786 + $0x14c] sm:$0xf]
    %v871 = vld [vmem:[%s786 + $0x150] sm:$0xf]
    %v872 = vld [vmem:[%s786 + $0x154] sm:$0xf]
    %v873 = vld [vmem:[%s786 + $0x158] sm:$0xf]
    %v874 = vld [vmem:[%s786 + $0x15c] sm:$0xf]
    %v875 = vld [vmem:[%s786 + $0x160] sm:$0xf]
    %v876 = vld [vmem:[%s786 + $0x164] sm:$0xf]
    %v877 = vld [vmem:[%s786 + $0x168] sm:$0xf]
    %v878 = vld [vmem:[%s786 + $0x16c] sm:$0xf]
    %v879 = vld [vmem:[%s786 + $0x170] sm:$0xf]
    %v880 = vld [vmem:[%s786 + $0x174] sm:$0xf]
    %v881 = vld [vmem:[%s786 + $0x178] sm:$0xf]
    %v882 = vld [vmem:[%s786 + $0x17c] sm:$0xf]
    %v883 = vld [vmem:[%s786 + $0x180] sm:$0xf]
    %v884 = vld [vmem:[%s786 + $0x184] sm:$0xf]
    %v885 = vld [vmem:[%s786 + $0x188] sm:$0xf]
    %v886 = vld [vmem:[%s786 + $0x18c] sm:$0xf]
    %v887 = vld [vmem:[%s786 + $0x190] sm:$0xf]
    %v888 = vld [vmem:[%s786 + $0x194] sm:$0xf]
    %v889 = vld [vmem:[%s786 + $0x198] sm:$0xf]
    %v890 = vld [vmem:[%s786 + $0x19c] sm:$0xf]
    %v891 = vld [vmem:[%s786 + $0x1a0] sm:$0xf]
    %v892 = vld [vmem:[%s786 + $0x1a4] sm:$0xf]
    %v893 = vld [vmem:[%s786 + $0x1a8] sm:$0xf]
    %v894 = vld [vmem:[%s786 + $0x1ac] sm:$0xf]
    %v895 = vld [vmem:[%s786 + $0x1b0] sm:$0xf]
    %v896 = vld [vmem:[%s786 + $0x1b4] sm:$0xf]
    %v897 = vld [vmem:[%s786 + $0x1b8] sm:$0xf]
    %v898 = vld [vmem:[%s786 + $0x1bc] sm:$0xf]
    %v899 = vld [vmem:[%s786 + $0x1c0] sm:$0xf]
    %v900 = vld [vmem:[%s786 + $0x1c4] sm:$0xf]
    %v901 = vld [vmem:[%s786 + $0x1c8] sm:$0xf]
    %v902 = vld [vmem:[%s786 + $0x1cc] sm:$0xf]
    %v903 = vld [vmem:[%s786 + $0x1d0] sm:$0xf]
    %v904 = vld [vmem:[%s786 + $0x1d4] sm:$0xf]
    %v905 = vld [vmem:[%s786 + $0x1d8] sm:$0xf]
    %v906 = vld [vmem:[%s786 + $0x1dc] sm:$0xf]
    %v907 = vld [vmem:[%s786 + $0x1e0] sm:$0xf]
    %v908 = vld [vmem:[%s786 + $0x1e4] sm:$0xf]
    %v909 = vld [vmem:[%s786 + $0x1e8] sm:$0xf]
    %v910 = vld [vmem:[%s786 + $0x1ec] sm:$0xf]
    %v911 = vld [vmem:[%s786 + $0x1f0] sm:$0xf]
    %v912 = vld [vmem:[%s786 + $0x1f4] sm:$0xf]
    %v913 = vld [vmem:[%s786 + $0x1f8] sm:$0xf]
    %v914 = vld [vmem:[%s786 + $0x1fc] sm:$0xf]
    %v1043 = vunpack.c.l.b16 %v787
    %v1044 = vunpack.c.l.b16 %v788
    %v1045 = vunpack.c.l.b16 %v789
    %v1046 = vunpack.c.l.b16 %v790
    %v1047 = vunpack.c.l.b16 %v791
    %v1048 = vunpack.c.l.b16 %v792
    %v1049 = vunpack.c.l.b16 %v793
    %v1050 = vunpack.c.l.b16 %v794
    %v1051 = vunpack.c.l.b16 %v795
    %v1052 = vunpack.c.l.b16 %v796
    %v1053 = vunpack.c.l.b16 %v797
    %v1054 = vunpack.c.l.b16 %v798
    %v1055 = vunpack.c.l.b16 %v799
    %v1056 = vunpack.c.l.b16 %v800
    %v1057 = vunpack.c.l.b16 %v801
    %v1058 = vunpack.c.l.b16 %v802
    %v1059 = vunpack.c.l.b16 %v803
    %v1060 = vunpack.c.l.b16 %v804
    %v1061 = vunpack.c.l.b16 %v805
    %v1062 = vunpack.c.l.b16 %v806
    %v1063 = vunpack.c.l.b16 %v807
    %v1064 = vunpack.c.l.b16 %v808
    %v1065 = vunpack.c.l.b16 %v809
    %v1066 = vunpack.c.l.b16 %v810
    %v1067 = vunpack.c.l.b16 %v811
    %v1068 = vunpack.c.l.b16 %v812
    %v1069 = vunpack.c.l.b16 %v813
    %v1070 = vunpack.c.l.b16 %v814
    %v1071 = vunpack.c.l.b16 %v815
    %v1072 = vunpack.c.l.b16 %v816
    %v1073 = vunpack.c.l.b16 %v817
    %v1074 = vunpack.c.l.b16 %v818
    %v1075 = vunpack.c.l.b16 %v819
    %v1076 = vunpack.c.l.b16 %v820
    %v1077 = vunpack.c.l.b16 %v821
    %v1078 = vunpack.c.l.b16 %v822
    %v1079 = vunpack.c.l.b16 %v823
    %v1080 = vunpack.c.l.b16 %v824
    %v1081 = vunpack.c.l.b16 %v825
    %v1082 = vunpack.c.l.b16 %v826
    %v1083 = vunpack.c.l.b16 %v827
    %v1084 = vunpack.c.l.b16 %v828
    %v1085 = vunpack.c.l.b16 %v829
    %v1086 = vunpack.c.l.b16 %v830
    %v1087 = vunpack.c.l.b16 %v831
    %v1088 = vunpack.c.l.b16 %v832
    %v1089 = vunpack.c.l.b16 %v833
    %v1090 = vunpack.c.l.b16 %v834
    %v1091 = vunpack.c.l.b16 %v835
    %v1092 = vunpack.c.l.b16 %v836
    %v1093 = vunpack.c.l.b16 %v837
    %v1094 = vunpack.c.l.b16 %v838
    %v1095 = vunpack.c.l.b16 %v839
    %v1096 = vunpack.c.l.b16 %v840
    %v1097 = vunpack.c.l.b16 %v841
    %v1098 = vunpack.c.l.b16 %v842
    %v1099 = vunpack.c.l.b16 %v843
    %v1100 = vunpack.c.l.b16 %v844
    %v1101 = vunpack.c.l.b16 %v845
    %v1102 = vunpack.c.l.b16 %v846
    %v1103 = vunpack.c.l.b16 %v847
    %v1104 = vunpack.c.l.b16 %v848
    %v1105 = vunpack.c.l.b16 %v849
    %v1106 = vunpack.c.l.b16 %v850
    %v1107 = vunpack.c.l.b16 %v851
    %v1108 = vunpack.c.l.b16 %v852
    %v1109 = vunpack.c.l.b16 %v853
    %v1110 = vunpack.c.l.b16 %v854
    %v1111 = vunpack.c.l.b16 %v855
    %v1112 = vunpack.c.l.b16 %v856
    %v1113 = vunpack.c.l.b16 %v857
    %v1114 = vunpack.c.l.b16 %v858
    %v1115 = vunpack.c.l.b16 %v859
    %v1116 = vunpack.c.l.b16 %v860
    %v1117 = vunpack.c.l.b16 %v861
    %v1118 = vunpack.c.l.b16 %v862
    %v1119 = vunpack.c.l.b16 %v863
    %v1120 = vunpack.c.l.b16 %v864
    %v1121 = vunpack.c.l.b16 %v865
    %v1122 = vunpack.c.l.b16 %v866
    %v1123 = vunpack.c.l.b16 %v867
    %v1124 = vunpack.c.l.b16 %v868
    %v1125 = vunpack.c.l.b16 %v869
    %v1126 = vunpack.c.l.b16 %v870
    %v1127 = vunpack.c.l.b16 %v871
    %v1128 = vunpack.c.l.b16 %v872
    %v1129 = vunpack.c.l.b16 %v873
    %v1130 = vunpack.c.l.b16 %v874
    %v1131 = vunpack.c.l.b16 %v875
    %v1132 = vunpack.c.l.b16 %v876
    %v1133 = vunpack.c.l.b16 %v877
    %v1134 = vunpack.c.l.b16 %v878
    %v1135 = vunpack.c.l.b16 %v879
    %v1136 = vunpack.c.l.b16 %v880
    %v1137 = vunpack.c.l.b16 %v881
    %v1138 = vunpack.c.l.b16 %v882
    %v1139 = vunpack.c.l.b16 %v883
    %v1140 = vunpack.c.l.b16 %v884
    %v1141 = vunpack.c.l.b16 %v885
    %v1142 = vunpack.c.l.b16 %v886
    %v1143 = vunpack.c.l.b16 %v887
    %v1144 = vunpack.c.l.b16 %v888
    %v1145 = vunpack.c.l.b16 %v889
    %v1146 = vunpack.c.l.b16 %v890
    %v1147 = vunpack.c.l.b16 %v891
    %v1148 = vunpack.c.l.b16 %v892
    %v1149 = vunpack.c.l.b16 %v893
    %v1150 = vunpack.c.l.b16 %v894
    %v1151 = vunpack.c.l.b16 %v895
    %v1152 = vunpack.c.l.b16 %v896
    %v1153 = vunpack.c.l.b16 %v897
    %v1154 = vunpack.c.l.b16 %v898
    %v1155 = vunpack.c.l.b16 %v899
    %v1156 = vunpack.c.l.b16 %v900
    %v1157 = vunpack.c.l.b16 %v901
    %v1158 = vunpack.c.l.b16 %v902
    %v1159 = vunpack.c.l.b16 %v903
    %v1160 = vunpack.c.l.b16 %v904
    %v1161 = vunpack.c.l.b16 %v905
    %v1162 = vunpack.c.l.b16 %v906
    %v1163 = vunpack.c.l.b16 %v907
    %v1164 = vunpack.c.l.b16 %v908
    %v1165 = vunpack.c.l.b16 %v909
    %v1166 = vunpack.c.l.b16 %v910
    %v1167 = vunpack.c.l.b16 %v911
    %v1168 = vunpack.c.l.b16 %v912
    %v1169 = vunpack.c.l.b16 %v913
    %v1170 = vunpack.c.l.b16 %v914
    %v1171 = vpack.c.b16 %v1044, %v1043
    %v1172 = vpack.c.b16 %v1046, %v1045
    %v1173 = vpack.c.b16 %v1048, %v1047
    %v1174 = vpack.c.b16 %v1050, %v1049
    %v1175 = vpack.c.b16 %v1052, %v1051
    %v1176 = vpack.c.b16 %v1054, %v1053
    %v1177 = vpack.c.b16 %v1056, %v1055
    %v1178 = vpack.c.b16 %v1058, %v1057
    %v1179 = vpack.c.b16 %v1060, %v1059
    %v1180 = vpack.c.b16 %v1062, %v1061
    %v1181 = vpack.c.b16 %v1064, %v1063
    %v1182 = vpack.c.b16 %v1066, %v1065
    %v1183 = vpack.c.b16 %v1068, %v1067
    %v1184 = vpack.c.b16 %v1070, %v1069
    %v1185 = vpack.c.b16 %v1072, %v1071
    %v1186 = vpack.c.b16 %v1074, %v1073
    %v1187 = vpack.c.b16 %v1076, %v1075
    %v1188 = vpack.c.b16 %v1078, %v1077
    %v1189 = vpack.c.b16 %v1080, %v1079
    %v1190 = vpack.c.b16 %v1082, %v1081
    %v1191 = vpack.c.b16 %v1084, %v1083
    %v1192 = vpack.c.b16 %v1086, %v1085
    %v1193 = vpack.c.b16 %v1088, %v1087
    %v1194 = vpack.c.b16 %v1090, %v1089
    %v1195 = vpack.c.b16 %v1092, %v1091
    %v1196 = vpack.c.b16 %v1094, %v1093
    %v1197 = vpack.c.b16 %v1096, %v1095
    %v1198 = vpack.c.b16 %v1098, %v1097
    %v1199 = vpack.c.b16 %v1100, %v1099
    %v1200 = vpack.c.b16 %v1102, %v1101
    %v1201 = vpack.c.b16 %v1104, %v1103
    %v1202 = vpack.c.b16 %v1106, %v1105
    %v1203 = vpack.c.b16 %v1108, %v1107
    %v1204 = vpack.c.b16 %v1110, %v1109
    %v1205 = vpack.c.b16 %v1112, %v1111
    %v1206 = vpack.c.b16 %v1114, %v1113
    %v1207 = vpack.c.b16 %v1116, %v1115
    %v1208 = vpack.c.b16 %v1118, %v1117
    %v1209 = vpack.c.b16 %v1120, %v1119
    %v1210 = vpack.c.b16 %v1122, %v1121
    %v1211 = vpack.c.b16 %v1124, %v1123
    %v1212 = vpack.c.b16 %v1126, %v1125
    %v1213 = vpack.c.b16 %v1128, %v1127
    %v1214 = vpack.c.b16 %v1130, %v1129
    %v1215 = vpack.c.b16 %v1132, %v1131
    %v1216 = vpack.c.b16 %v1134, %v1133
    %v1217 = vpack.c.b16 %v1136, %v1135
    %v1218 = vpack.c.b16 %v1138, %v1137
    %v1219 = vpack.c.b16 %v1140, %v1139
    %v1220 = vpack.c.b16 %v1142, %v1141
    %v1221 = vpack.c.b16 %v1144, %v1143
    %v1222 = vpack.c.b16 %v1146, %v1145
    %v1223 = vpack.c.b16 %v1148, %v1147
    %v1224 = vpack.c.b16 %v1150, %v1149
    %v1225 = vpack.c.b16 %v1152, %v1151
    %v1226 = vpack.c.b16 %v1154, %v1153
    %v1227 = vpack.c.b16 %v1156, %v1155
    %v1228 = vpack.c.b16 %v1158, %v1157
    %v1229 = vpack.c.b16 %v1160, %v1159
    %v1230 = vpack.c.b16 %v1162, %v1161
    %v1231 = vpack.c.b16 %v1164, %v1163
    %v1232 = vpack.c.b16 %v1166, %v1165
    %v1233 = vpack.c.b16 %v1168, %v1167
    %v1234 = vpack.c.b16 %v1170, %v1169
    %1299 = vmatprep.subr.bf16.mxu0 0
    %1300 = vmatpush1.bf16.msra.mxu0 %v1171
    %1301 = vmatprep.subr.bf16.mxu0 0
    %1302 = vmatpush1.bf16.msra.mxu0 %v1172
    %1303 = vmatprep.subr.bf16.mxu0 0
    %1304 = vmatpush1.bf16.msra.mxu0 %v1173
    %1305 = vmatprep.subr.bf16.mxu0 0
    %1306 = vmatpush1.bf16.msra.mxu0 %v1174
    %1307 = vmatprep.subr.bf16.mxu0 0
    %1308 = vmatpush1.bf16.msra.mxu0 %v1175
    %1309 = vmatprep.subr.bf16.mxu0 0
    %1310 = vmatpush1.bf16.msra.mxu0 %v1176
    %1311 = vmatprep.subr.bf16.mxu0 0
    %1312 = vmatpush1.bf16.msra.mxu0 %v1177
    %1313 = vmatprep.subr.bf16.mxu0 0
    %1314 = vmatpush1.bf16.msra.mxu0 %v1178
    %1315 = vmatprep.subr.bf16.mxu0 0
    %1316 = vmatpush1.bf16.msra.mxu0 %v1179
    %1317 = vmatprep.subr.bf16.mxu0 0
    %1318 = vmatpush1.bf16.msra.mxu0 %v1180
    %1319 = vmatprep.subr.bf16.mxu0 0
    %1320 = vmatpush1.bf16.msra.mxu0 %v1181
    %1321 = vmatprep.subr.bf16.mxu0 0
    %1322 = vmatpush1.bf16.msra.mxu0 %v1182
    %1323 = vmatprep.subr.bf16.mxu0 0
    %1324 = vmatpush1.bf16.msra.mxu0 %v1183
    %1325 = vmatprep.subr.bf16.mxu0 0
    %1326 = vmatpush1.bf16.msra.mxu0 %v1184
    %1327 = vmatprep.subr.bf16.mxu0 0
    %1328 = vmatpush1.bf16.msra.mxu0 %v1185
    %1329 = vmatprep.subr.bf16.mxu0 0
    %1330 = vmatpush1.bf16.msra.mxu0 %v1186
    %1331 = vmatprep.mubr.bf16.mxu0 %v225
    %1332 = vmatmul.mubr.bf16.gmra.mrb[0].mxu0 %v224
    %v1333 = vpop.f32.mrb[0].mxu0
    %v1334 = vadd.f32 0.0, %v1333
    %v1335 = vpop.f32.mrb[0].mxu0
    %v1336 = vpop.f32.mrb[0].mxu0
    %v1337 = vpop.f32.mrb[0].mxu0
    %1338 = vdwg.mxu0
    %1339 = vmatprep.subr.bf16.mxu0 0
    %1340 = vmatpush1.bf16.msra.mxu0 %v1187
    %1341 = vmatprep.subr.bf16.mxu0 0
    %1342 = vmatpush1.bf16.msra.mxu0 %v1188
    %1343 = vmatprep.subr.bf16.mxu0 0
    %1344 = vmatpush1.bf16.msra.mxu0 %v1189
    %1345 = vmatprep.subr.bf16.mxu0 0
    %1346 = vmatpush1.bf16.msra.mxu0 %v1190
    %1347 = vmatprep.subr.bf16.mxu0 0
    %1348 = vmatpush1.bf16.msra.mxu0 %v1191
    %1349 = vmatprep.subr.bf16.mxu0 0
    %1350 = vmatpush1.bf16.msra.mxu0 %v1192
    %1351 = vmatprep.subr.bf16.mxu0 0
    %1352 = vmatpush1.bf16.msra.mxu0 %v1193
    %1353 = vmatprep.subr.bf16.mxu0 0
    %1354 = vmatpush1.bf16.msra.mxu0 %v1194
    %1355 = vmatprep.subr.bf16.mxu0 0
    %1356 = vmatpush1.bf16.msra.mxu0 %v1195
    %1357 = vmatprep.subr.bf16.mxu0 0
    %1358 = vmatpush1.bf16.msra.mxu0 %v1196
    %1359 = vmatprep.subr.bf16.mxu0 0
    %1360 = vmatpush1.bf16.msra.mxu0 %v1197
    %1361 = vmatprep.subr.bf16.mxu0 0
    %1362 = vmatpush1.bf16.msra.mxu0 %v1198
    %1363 = vmatprep.subr.bf16.mxu0 0
    %1364 = vmatpush1.bf16.msra.mxu0 %v1199
    %1365 = vmatprep.subr.bf16.mxu0 0
    %1366 = vmatpush1.bf16.msra.mxu0 %v1200
    %1367 = vmatprep.subr.bf16.mxu0 0
    %1368 = vmatpush1.bf16.msra.mxu0 %v1201
    %1369 = vmatprep.subr.bf16.mxu0 0
    %1370 = vmatpush1.bf16.msra.mxu0 %v1202
    %1371 = vmatprep.mubr.bf16.mxu0 %v227
    %1372 = vmatmul.mubr.bf16.gmra.mrb[0].mxu0 %v226
    %v1373 = vpop.f32.mrb[0].mxu0
    %v1374 = vadd.f32 %v1334, %v1373
    %v1375 = vpop.f32.mrb[0].mxu0
    %v1376 = vpop.f32.mrb[0].mxu0
    %v1377 = vpop.f32.mrb[0].mxu0
    %1378 = vdwg.mxu0
    %1379 = vmatprep.subr.bf16.mxu0 0
    %1380 = vmatpush1.bf16.msra.mxu0 %v1203
    %1381 = vmatprep.subr.bf16.mxu0 0
    %1382 = vmatpush1.bf16.msra.mxu0 %v1204
    %1383 = vmatprep.subr.bf16.mxu0 0
    %1384 = vmatpush1.bf16.msra.mxu0 %v1205
    %1385 = vmatprep.subr.bf16.mxu0 0
    %1386 = vmatpush1.bf16.msra.mxu0 %v1206
    %1387 = vmatprep.subr.bf16.mxu0 0
    %1388 = vmatpush1.bf16.msra.mxu0 %v1207
    %1389 = vmatprep.subr.bf16.mxu0 0
    %1390 = vmatpush1.bf16.msra.mxu0 %v1208
    %1391 = vmatprep.subr.bf16.mxu0 0
    %1392 = vmatpush1.bf16.msra.mxu0 %v1209
    %1393 = vmatprep.subr.bf16.mxu0 0
    %1394 = vmatpush1.bf16.msra.mxu0 %v1210
    %1395 = vmatprep.subr.bf16.mxu0 0
    %1396 = vmatpush1.bf16.msra.mxu0 %v1211
    %1397 = vmatprep.subr.bf16.mxu0 0
    %1398 = vmatpush1.bf16.msra.mxu0 %v1212
    %1399 = vmatprep.subr.bf16.mxu0 0
    %1400 = vmatpush1.bf16.msra.mxu0 %v1213
    %1401 = vmatprep.subr.bf16.mxu0 0
    %1402 = vmatpush1.bf16.msra.mxu0 %v1214
    %1403 = vmatprep.subr.bf16.mxu0 0
    %1404 = vmatpush1.bf16.msra.mxu0 %v1215
    %1405 = vmatprep.subr.bf16.mxu0 0
    %1406 = vmatpush1.bf16.msra.mxu0 %v1216
    %1407 = vmatprep.subr.bf16.mxu0 0
    %1408 = vmatpush1.bf16.msra.mxu0 %v1217
    %1409 = vmatprep.subr.bf16.mxu0 0
    %1410 = vmatpush1.bf16.msra.mxu0 %v1218
    %1411 = vmatprep.mubr.bf16.mxu0 %v229
    %1412 = vmatmul.mubr.bf16.gmra.mrb[0].mxu0 %v228
    %v1413 = vpop.f32.mrb[0].mxu0
    %v1414 = vadd.f32 %v1374, %v1413
    %v1415 = vpop.f32.mrb[0].mxu0
    %v1416 = vpop.f32.mrb[0].mxu0
    %v1417 = vpop.f32.mrb[0].mxu0
    %1418 = vdwg.mxu0
    %1419 = vmatprep.subr.bf16.mxu0 0
    %1420 = vmatpush1.bf16.msra.mxu0 %v1219
    %1421 = vmatprep.subr.bf16.mxu0 0
    %1422 = vmatpush1.bf16.msra.mxu0 %v1220
    %1423 = vmatprep.subr.bf16.mxu0 0
    %1424 = vmatpush1.bf16.msra.mxu0 %v1221
    %1425 = vmatprep.subr.bf16.mxu0 0
    %1426 = vmatpush1.bf16.msra.mxu0 %v1222
    %1427 = vmatprep.subr.bf16.mxu0 0
    %1428 = vmatpush1.bf16.msra.mxu0 %v1223
    %1429 = vmatprep.subr.bf16.mxu0 0
    %1430 = vmatpush1.bf16.msra.mxu0 %v1224
    %1431 = vmatprep.subr.bf16.mxu0 0
    %1432 = vmatpush1.bf16.msra.mxu0 %v1225
    %1433 = vmatprep.subr.bf16.mxu0 0
    %1434 = vmatpush1.bf16.msra.mxu0 %v1226
    %1435 = vmatprep.subr.bf16.mxu0 0
    %1436 = vmatpush1.bf16.msra.mxu0 %v1227
    %1437 = vmatprep.subr.bf16.mxu0 0
    %1438 = vmatpush1.bf16.msra.mxu0 %v1228
    %1439 = vmatprep.subr.bf16.mxu0 0
    %1440 = vmatpush1.bf16.msra.mxu0 %v1229
    %1441 = vmatprep.subr.bf16.mxu0 0
    %1442 = vmatpush1.bf16.msra.mxu0 %v1230
    %1443 = vmatprep.subr.bf16.mxu0 0
    %1444 = vmatpush1.bf16.msra.mxu0 %v1231
    %1445 = vmatprep.subr.bf16.mxu0 0
    %1446 = vmatpush1.bf16.msra.mxu0 %v1232
    %1447 = vmatprep.subr.bf16.mxu0 0
    %1448 = vmatpush1.bf16.msra.mxu0 %v1233
    %1449 = vmatprep.subr.bf16.mxu0 0
    %1450 = vmatpush1.bf16.msra.mxu0 %v1234
    %1451 = vmatprep.mubr.bf16.mxu0 %v231
    %1452 = vmatmul.mubr.bf16.gmra.mrb[0].mxu0 %v230
    %v1453 = vpop.f32.mrb[0].mxu0
    %v1454 = vadd.f32 %v1414, %v1453
    %v1455 = vpop.f32.mrb[0].mxu0
    %v1456 = vpop.f32.mrb[0].mxu0
    %v1457 = vpop.f32.mrb[0].mxu0
    %1458 = vdwg.mxu0
    %v1459 = vstv %s69
    %v1460 = vmul.f32 %v1454, %v1459
    %v1461 = vadd.f32 %v785, %v1460
    %s1462 = scalar_lea.vmem [#allocation5], 1024
    %v1463 = vld [vmem:[%s1462] sm:$0xf]
    %v1464 = vld [vmem:[%s1462 + $0x4] sm:$0xf]
    %v1465 = vld [vmem:[%s1462 + $0x8] sm:$0xf]
    %v1466 = vld [vmem:[%s1462 + $0xc] sm:$0xf]
    %v1467 = vld [vmem:[%s1462 + $0x10] sm:$0xf]
    %v1468 = vld [vmem:[%s1462 + $0x14] sm:$0xf]
    %v1469 = vld [vmem:[%s1462 + $0x18] sm:$0xf]
    %v1470 = vld [vmem:[%s1462 + $0x1c] sm:$0xf]
    %v1471 = vld [vmem:[%s1462 + $0x20] sm:$0xf]
    %v1472 = vld [vmem:[%s1462 + $0x24] sm:$0xf]
    %v1473 = vld [vmem:[%s1462 + $0x28] sm:$0xf]
    %v1474 = vld [vmem:[%s1462 + $0x2c] sm:$0xf]
    %v1475 = vld [vmem:[%s1462 + $0x30] sm:$0xf]
    %v1476 = vld [vmem:[%s1462 + $0x34] sm:$0xf]
    %v1477 = vld [vmem:[%s1462 + $0x38] sm:$0xf]
    %v1478 = vld [vmem:[%s1462 + $0x3c] sm:$0xf]
    %v1479 = vld [vmem:[%s1462 + $0x40] sm:$0xf]
    %v1480 = vld [vmem:[%s1462 + $0x44] sm:$0xf]
    %v1481 = vld [vmem:[%s1462 + $0x48] sm:$0xf]
    %v1482 = vld [vmem:[%s1462 + $0x4c] sm:$0xf]
    %v1483 = vld [vmem:[%s1462 + $0x50] sm:$0xf]
    %v1484 = vld [vmem:[%s1462 + $0x54] sm:$0xf]
    %v1485 = vld [vmem:[%s1462 + $0x58] sm:$0xf]
    %v1486 = vld [vmem:[%s1462 + $0x5c] sm:$0xf]
    %v1487 = vld [vmem:[%s1462 + $0x60] sm:$0xf]
    %v1488 = vld [vmem:[%s1462 + $0x64] sm:$0xf]
    %v1489 = vld [vmem:[%s1462 + $0x68] sm:$0xf]
    %v1490 = vld [vmem:[%s1462 + $0x6c] sm:$0xf]
    %v1491 = vld [vmem:[%s1462 + $0x70] sm:$0xf]
    %v1492 = vld [vmem:[%s1462 + $0x74] sm:$0xf]
    %v1493 = vld [vmem:[%s1462 + $0x78] sm:$0xf]
    %v1494 = vld [vmem:[%s1462 + $0x7c] sm:$0xf]
    %v1495 = vld [vmem:[%s1462 + $0x80] sm:$0xf]
    %v1496 = vld [vmem:[%s1462 + $0x84] sm:$0xf]
    %v1497 = vld [vmem:[%s1462 + $0x88] sm:$0xf]
    %v1498 = vld [vmem:[%s1462 + $0x8c] sm:$0xf]
    %v1499 = vld [vmem:[%s1462 + $0x90] sm:$0xf]
    %v1500 = vld [vmem:[%s1462 + $0x94] sm:$0xf]
    %v1501 = vld [vmem:[%s1462 + $0x98] sm:$0xf]
    %v1502 = vld [vmem:[%s1462 + $0x9c] sm:$0xf]
    %v1503 = vld [vmem:[%s1462 + $0xa0] sm:$0xf]
    %v1504 = vld [vmem:[%s1462 + $0xa4] sm:$0xf]
    %v1505 = vld [vmem:[%s1462 + $0xa8] sm:$0xf]
    %v1506 = vld [vmem:[%s1462 + $0xac] sm:$0xf]
    %v1507 = vld [vmem:[%s1462 + $0xb0] sm:$0xf]
    %v1508 = vld [vmem:[%s1462 + $0xb4] sm:$0xf]
    %v1509 = vld [vmem:[%s1462 + $0xb8] sm:$0xf]
    %v1510 = vld [vmem:[%s1462 + $0xbc] sm:$0xf]
    %v1511 = vld [vmem:[%s1462 + $0xc0] sm:$0xf]
    %v1512 = vld [vmem:[%s1462 + $0xc4] sm:$0xf]
    %v1513 = vld [vmem:[%s1462 + $0xc8] sm:$0xf]
    %v1514 = vld [vmem:[%s1462 + $0xcc] sm:$0xf]
    %v1515 = vld [vmem:[%s1462 + $0xd0] sm:$0xf]
    %v1516 = vld [vmem:[%s1462 + $0xd4] sm:$0xf]
    %v1517 = vld [vmem:[%s1462 + $0xd8] sm:$0xf]
    %v1518 = vld [vmem:[%s1462 + $0xdc] sm:$0xf]
    %v1519 = vld [vmem:[%s1462 + $0xe0] sm:$0xf]
    %v1520 = vld [vmem:[%s1462 + $0xe4] sm:$0xf]
    %v1521 = vld [vmem:[%s1462 + $0xe8] sm:$0xf]
    %v1522 = vld [vmem:[%s1462 + $0xec] sm:$0xf]
    %v1523 = vld [vmem:[%s1462 + $0xf0] sm:$0xf]
    %v1524 = vld [vmem:[%s1462 + $0xf4] sm:$0xf]
    %v1525 = vld [vmem:[%s1462 + $0xf8] sm:$0xf]
    %v1526 = vld [vmem:[%s1462 + $0xfc] sm:$0xf]
    %v1527 = vld [vmem:[%s1462 + $0x100] sm:$0xf]
    %v1528 = vld [vmem:[%s1462 + $0x104] sm:$0xf]
    %v1529 = vld [vmem:[%s1462 + $0x108] sm:$0xf]
    %v1530 = vld [vmem:[%s1462 + $0x10c] sm:$0xf]
    %v1531 = vld [vmem:[%s1462 + $0x110] sm:$0xf]
    %v1532 = vld [vmem:[%s1462 + $0x114] sm:$0xf]
    %v1533 = vld [vmem:[%s1462 + $0x118] sm:$0xf]
    %v1534 = vld [vmem:[%s1462 + $0x11c] sm:$0xf]
    %v1535 = vld [vmem:[%s1462 + $0x120] sm:$0xf]
    %v1536 = vld [vmem:[%s1462 + $0x124] sm:$0xf]
    %v1537 = vld [vmem:[%s1462 + $0x128] sm:$0xf]
    %v1538 = vld [vmem:[%s1462 + $0x12c] sm:$0xf]
    %v1539 = vld [vmem:[%s1462 + $0x130] sm:$0xf]
    %v1540 = vld [vmem:[%s1462 + $0x134] sm:$0xf]
    %v1541 = vld [vmem:[%s1462 + $0x138] sm:$0xf]
    %v1542 = vld [vmem:[%s1462 + $0x13c] sm:$0xf]
    %v1543 = vld [vmem:[%s1462 + $0x140] sm:$0xf]
    %v1544 = vld [vmem:[%s1462 + $0x144] sm:$0xf]
    %v1545 = vld [vmem:[%s1462 + $0x148] sm:$0xf]
    %v1546 = vld [vmem:[%s1462 + $0x14c] sm:$0xf]
    %v1547 = vld [vmem:[%s1462 + $0x150] sm:$0xf]
    %v1548 = vld [vmem:[%s1462 + $0x154] sm:$0xf]
    %v1549 = vld [vmem:[%s1462 + $0x158] sm:$0xf]
    %v1550 = vld [vmem:[%s1462 + $0x15c] sm:$0xf]
    %v1551 = vld [vmem:[%s1462 + $0x160] sm:$0xf]
    %v1552 = vld [vmem:[%s1462 + $0x164] sm:$0xf]
    %v1553 = vld [vmem:[%s1462 + $0x168] sm:$0xf]
    %v1554 = vld [vmem:[%s1462 + $0x16c] sm:$0xf]
    %v1555 = vld [vmem:[%s1462 + $0x170] sm:$0xf]
    %v1556 = vld [vmem:[%s1462 + $0x174] sm:$0xf]
    %v1557 = vld [vmem:[%s1462 + $0x178] sm:$0xf]
    %v1558 = vld [vmem:[%s1462 + $0x17c] sm:$0xf]
    %v1559 = vld [vmem:[%s1462 + $0x180] sm:$0xf]
    %v1560 = vld [vmem:[%s1462 + $0x184] sm:$0xf]
    %v1561 = vld [vmem:[%s1462 + $0x188] sm:$0xf]
    %v1562 = vld [vmem:[%s1462 + $0x18c] sm:$0xf]
    %v1563 = vld [vmem:[%s1462 + $0x190] sm:$0xf]
    %v1564 = vld [vmem:[%s1462 + $0x194] sm:$0xf]
    %v1565 = vld [vmem:[%s1462 + $0x198] sm:$0xf]
    %v1566 = vld [vmem:[%s1462 + $0x19c] sm:$0xf]
    %v1567 = vld [vmem:[%s1462 + $0x1a0] sm:$0xf]
    %v1568 = vld [vmem:[%s1462 + $0x1a4] sm:$0xf]
    %v1569 = vld [vmem:[%s1462 + $0x1a8] sm:$0xf]
    %v1570 = vld [vmem:[%s1462 + $0x1ac] sm:$0xf]
    %v1571 = vld [vmem:[%s1462 + $0x1b0] sm:$0xf]
    %v1572 = vld [vmem:[%s1462 + $0x1b4] sm:$0xf]
    %v1573 = vld [vmem:[%s1462 + $0x1b8] sm:$0xf]
    %v1574 = vld [vmem:[%s1462 + $0x1bc] sm:$0xf]
    %v1575 = vld [vmem:[%s1462 + $0x1c0] sm:$0xf]
    %v1576 = vld [vmem:[%s1462 + $0x1c4] sm:$0xf]
    %v1577 = vld [vmem:[%s1462 + $0x1c8] sm:$0xf]
    %v1578 = vld [vmem:[%s1462 + $0x1cc] sm:$0xf]
    %v1579 = vld [vmem:[%s1462 + $0x1d0] sm:$0xf]
    %v1580 = vld [vmem:[%s1462 + $0x1d4] sm:$0xf]
    %v1581 = vld [vmem:[%s1462 + $0x1d8] sm:$0xf]
    %v1582 = vld [vmem:[%s1462 + $0x1dc] sm:$0xf]
    %v1583 = vld [vmem:[%s1462 + $0x1e0] sm:$0xf]
    %v1584 = vld [vmem:[%s1462 + $0x1e4] sm:$0xf]
    %v1585 = vld [vmem:[%s1462 + $0x1e8] sm:$0xf]
    %v1586 = vld [vmem:[%s1462 + $0x1ec] sm:$0xf]
    %v1587 = vld [vmem:[%s1462 + $0x1f0] sm:$0xf]
    %v1588 = vld [vmem:[%s1462 + $0x1f4] sm:$0xf]
    %v1589 = vld [vmem:[%s1462 + $0x1f8] sm:$0xf]
    %v1590 = vld [vmem:[%s1462 + $0x1fc] sm:$0xf]
    %v1719 = vunpack.c.l.b16 %v1463
    %v1720 = vunpack.c.l.b16 %v1464
    %v1721 = vunpack.c.l.b16 %v1465
    %v1722 = vunpack.c.l.b16 %v1466
    %v1723 = vunpack.c.l.b16 %v1467
    %v1724 = vunpack.c.l.b16 %v1468
    %v1725 = vunpack.c.l.b16 %v1469
    %v1726 = vunpack.c.l.b16 %v1470
    %v1727 = vunpack.c.l.b16 %v1471
    %v1728 = vunpack.c.l.b16 %v1472
    %v1729 = vunpack.c.l.b16 %v1473
    %v1730 = vunpack.c.l.b16 %v1474
    %v1731 = vunpack.c.l.b16 %v1475
    %v1732 = vunpack.c.l.b16 %v1476
    %v1733 = vunpack.c.l.b16 %v1477
    %v1734 = vunpack.c.l.b16 %v1478
    %v1735 = vunpack.c.l.b16 %v1479
    %v1736 = vunpack.c.l.b16 %v1480
    %v1737 = vunpack.c.l.b16 %v1481
    %v1738 = vunpack.c.l.b16 %v1482
    %v1739 = vunpack.c.l.b16 %v1483
    %v1740 = vunpack.c.l.b16 %v1484
    %v1741 = vunpack.c.l.b16 %v1485
    %v1742 = vunpack.c.l.b16 %v1486
    %v1743 = vunpack.c.l.b16 %v1487
    %v1744 = vunpack.c.l.b16 %v1488
    %v1745 = vunpack.c.l.b16 %v1489
    %v1746 = vunpack.c.l.b16 %v1490
    %v1747 = vunpack.c.l.b16 %v1491
    %v1748 = vunpack.c.l.b16 %v1492
    %v1749 = vunpack.c.l.b16 %v1493
    %v1750 = vunpack.c.l.b16 %v1494
    %v1751 = vunpack.c.l.b16 %v1495
    %v1752 = vunpack.c.l.b16 %v1496
    %v1753 = vunpack.c.l.b16 %v1497
    %v1754 = vunpack.c.l.b16 %v1498
    %v1755 = vunpack.c.l.b16 %v1499
    %v1756 = vunpack.c.l.b16 %v1500
    %v1757 = vunpack.c.l.b16 %v1501
    %v1758 = vunpack.c.l.b16 %v1502
    %v1759 = vunpack.c.l.b16 %v1503
    %v1760 = vunpack.c.l.b16 %v1504
    %v1761 = vunpack.c.l.b16 %v1505
    %v1762 = vunpack.c.l.b16 %v1506
    %v1763 = vunpack.c.l.b16 %v1507
    %v1764 = vunpack.c.l.b16 %v1508
    %v1765 = vunpack.c.l.b16 %v1509
    %v1766 = vunpack.c.l.b16 %v1510
    %v1767 = vunpack.c.l.b16 %v1511
    %v1768 = vunpack.c.l.b16 %v1512
    %v1769 = vunpack.c.l.b16 %v1513
    %v1770 = vunpack.c.l.b16 %v1514
    %v1771 = vunpack.c.l.b16 %v1515
    %v1772 = vunpack.c.l.b16 %v1516
    %v1773 = vunpack.c.l.b16 %v1517
    %v1774 = vunpack.c.l.b16 %v1518
    %v1775 = vunpack.c.l.b16 %v1519
    %v1776 = vunpack.c.l.b16 %v1520
    %v1777 = vunpack.c.l.b16 %v1521
    %v1778 = vunpack.c.l.b16 %v1522
    %v1779 = vunpack.c.l.b16 %v1523
    %v1780 = vunpack.c.l.b16 %v1524
    %v1781 = vunpack.c.l.b16 %v1525
    %v1782 = vunpack.c.l.b16 %v1526
    %v1783 = vunpack.c.l.b16 %v1527
    %v1784 = vunpack.c.l.b16 %v1528
    %v1785 = vunpack.c.l.b16 %v1529
    %v1786 = vunpack.c.l.b16 %v1530
    %v1787 = vunpack.c.l.b16 %v1531
    %v1788 = vunpack.c.l.b16 %v1532
    %v1789 = vunpack.c.l.b16 %v1533
    %v1790 = vunpack.c.l.b16 %v1534
    %v1791 = vunpack.c.l.b16 %v1535
    %v1792 = vunpack.c.l.b16 %v1536
    %v1793 = vunpack.c.l.b16 %v1537
    %v1794 = vunpack.c.l.b16 %v1538
    %v1795 = vunpack.c.l.b16 %v1539
    %v1796 = vunpack.c.l.b16 %v1540
    %v1797 = vunpack.c.l.b16 %v1541
    %v1798 = vunpack.c.l.b16 %v1542
    %v1799 = vunpack.c.l.b16 %v1543
    %v1800 = vunpack.c.l.b16 %v1544
    %v1801 = vunpack.c.l.b16 %v1545
    %v1802 = vunpack.c.l.b16 %v1546
    %v1803 = vunpack.c.l.b16 %v1547
    %v1804 = vunpack.c.l.b16 %v1548
    %v1805 = vunpack.c.l.b16 %v1549
    %v1806 = vunpack.c.l.b16 %v1550
    %v1807 = vunpack.c.l.b16 %v1551
    %v1808 = vunpack.c.l.b16 %v1552
    %v1809 = vunpack.c.l.b16 %v1553
    %v1810 = vunpack.c.l.b16 %v1554
    %v1811 = vunpack.c.l.b16 %v1555
    %v1812 = vunpack.c.l.b16 %v1556
    %v1813 = vunpack.c.l.b16 %v1557
    %v1814 = vunpack.c.l.b16 %v1558
    %v1815 = vunpack.c.l.b16 %v1559
    %v1816 = vunpack.c.l.b16 %v1560
    %v1817 = vunpack.c.l.b16 %v1561
    %v1818 = vunpack.c.l.b16 %v1562
    %v1819 = vunpack.c.l.b16 %v1563
    %v1820 = vunpack.c.l.b16 %v1564
    %v1821 = vunpack.c.l.b16 %v1565
    %v1822 = vunpack.c.l.b16 %v1566
    %v1823 = vunpack.c.l.b16 %v1567
    %v1824 = vunpack.c.l.b16 %v1568
    %v1825 = vunpack.c.l.b16 %v1569
    %v1826 = vunpack.c.l.b16 %v1570
    %v1827 = vunpack.c.l.b16 %v1571
    %v1828 = vunpack.c.l.b16 %v1572
    %v1829 = vunpack.c.l.b16 %v1573
    %v1830 = vunpack.c.l.b16 %v1574
    %v1831 = vunpack.c.l.b16 %v1575
    %v1832 = vunpack.c.l.b16 %v1576
    %v1833 = vunpack.c.l.b16 %v1577
    %v1834 = vunpack.c.l.b16 %v1578
    %v1835 = vunpack.c.l.b16 %v1579
    %v1836 = vunpack.c.l.b16 %v1580
    %v1837 = vunpack.c.l.b16 %v1581
    %v1838 = vunpack.c.l.b16 %v1582
    %v1839 = vunpack.c.l.b16 %v1583
    %v1840 = vunpack.c.l.b16 %v1584
    %v1841 = vunpack.c.l.b16 %v1585
    %v1842 = vunpack.c.l.b16 %v1586
    %v1843 = vunpack.c.l.b16 %v1587
    %v1844 = vunpack.c.l.b16 %v1588
    %v1845 = vunpack.c.l.b16 %v1589
    %v1846 = vunpack.c.l.b16 %v1590
    %v1847 = vpack.c.b16 %v1720, %v1719
    %v1848 = vpack.c.b16 %v1722, %v1721
    %v1849 = vpack.c.b16 %v1724, %v1723
    %v1850 = vpack.c.b16 %v1726, %v1725
    %v1851 = vpack.c.b16 %v1728, %v1727
    %v1852 = vpack.c.b16 %v1730, %v1729
    %v1853 = vpack.c.b16 %v1732, %v1731
    %v1854 = vpack.c.b16 %v1734, %v1733
    %v1855 = vpack.c.b16 %v1736, %v1735
    %v1856 = vpack.c.b16 %v1738, %v1737
    %v1857 = vpack.c.b16 %v1740, %v1739
    %v1858 = vpack.c.b16 %v1742, %v1741
    %v1859 = vpack.c.b16 %v1744, %v1743
    %v1860 = vpack.c.b16 %v1746, %v1745
    %v1861 = vpack.c.b16 %v1748, %v1747
    %v1862 = vpack.c.b16 %v1750, %v1749
    %v1863 = vpack.c.b16 %v1752, %v1751
    %v1864 = vpack.c.b16 %v1754, %v1753
    %v1865 = vpack.c.b16 %v1756, %v1755
    %v1866 = vpack.c.b16 %v1758, %v1757
    %v1867 = vpack.c.b16 %v1760, %v1759
    %v1868 = vpack.c.b16 %v1762, %v1761
    %v1869 = vpack.c.b16 %v1764, %v1763
    %v1870 = vpack.c.b16 %v1766, %v1765
    %v1871 = vpack.c.b16 %v1768, %v1767
    %v1872 = vpack.c.b16 %v1770, %v1769
    %v1873 = vpack.c.b16 %v1772, %v1771
    %v1874 = vpack.c.b16 %v1774, %v1773
    %v1875 = vpack.c.b16 %v1776, %v1775
    %v1876 = vpack.c.b16 %v1778, %v1777
    %v1877 = vpack.c.b16 %v1780, %v1779
    %v1878 = vpack.c.b16 %v1782, %v1781
    %v1879 = vpack.c.b16 %v1784, %v1783
    %v1880 = vpack.c.b16 %v1786, %v1785
    %v1881 = vpack.c.b16 %v1788, %v1787
    %v1882 = vpack.c.b16 %v1790, %v1789
    %v1883 = vpack.c.b16 %v1792, %v1791
    %v1884 = vpack.c.b16 %v1794, %v1793
    %v1885 = vpack.c.b16 %v1796, %v1795
    %v1886 = vpack.c.b16 %v1798, %v1797
    %v1887 = vpack.c.b16 %v1800, %v1799
    %v1888 = vpack.c.b16 %v1802, %v1801
    %v1889 = vpack.c.b16 %v1804, %v1803
    %v1890 = vpack.c.b16 %v1806, %v1805
    %v1891 = vpack.c.b16 %v1808, %v1807
    %v1892 = vpack.c.b16 %v1810, %v1809
    %v1893 = vpack.c.b16 %v1812, %v1811
    %v1894 = vpack.c.b16 %v1814, %v1813
    %v1895 = vpack.c.b16 %v1816, %v1815
    %v1896 = vpack.c.b16 %v1818, %v1817
    %v1897 = vpack.c.b16 %v1820, %v1819
    %v1898 = vpack.c.b16 %v1822, %v1821
    %v1899 = vpack.c.b16 %v1824, %v1823
    %v1900 = vpack.c.b16 %v1826, %v1825
    %v1901 = vpack.c.b16 %v1828, %v1827
    %v1902 = vpack.c.b16 %v1830, %v1829
    %v1903 = vpack.c.b16 %v1832, %v1831
    %v1904 = vpack.c.b16 %v1834, %v1833
    %v1905 = vpack.c.b16 %v1836, %v1835
    %v1906 = vpack.c.b16 %v1838, %v1837
    %v1907 = vpack.c.b16 %v1840, %v1839
    %v1908 = vpack.c.b16 %v1842, %v1841
    %v1909 = vpack.c.b16 %v1844, %v1843
    %v1910 = vpack.c.b16 %v1846, %v1845
    %1975 = vmatprep.subr.bf16.mxu0 0
    %1976 = vmatpush1.bf16.msra.mxu0 %v1847
    %1977 = vmatprep.subr.bf16.mxu0 0
    %1978 = vmatpush1.bf16.msra.mxu0 %v1848
    %1979 = vmatprep.subr.bf16.mxu0 0
    %1980 = vmatpush1.bf16.msra.mxu0 %v1849
    %1981 = vmatprep.subr.bf16.mxu0 0
    %1982 = vmatpush1.bf16.msra.mxu0 %v1850
    %1983 = vmatprep.subr.bf16.mxu0 0
    %1984 = vmatpush1.bf16.msra.mxu0 %v1851
    %1985 = vmatprep.subr.bf16.mxu0 0
    %1986 = vmatpush1.bf16.msra.mxu0 %v1852
    %1987 = vmatprep.subr.bf16.mxu0 0
    %1988 = vmatpush1.bf16.msra.mxu0 %v1853
    %1989 = vmatprep.subr.bf16.mxu0 0
    %1990 = vmatpush1.bf16.msra.mxu0 %v1854
    %1991 = vmatprep.subr.bf16.mxu0 0
    %1992 = vmatpush1.bf16.msra.mxu0 %v1855
    %1993 = vmatprep.subr.bf16.mxu0 0
    %1994 = vmatpush1.bf16.msra.mxu0 %v1856
    %1995 = vmatprep.subr.bf16.mxu0 0
    %1996 = vmatpush1.bf16.msra.mxu0 %v1857
    %1997 = vmatprep.subr.bf16.mxu0 0
    %1998 = vmatpush1.bf16.msra.mxu0 %v1858
    %1999 = vmatprep.subr.bf16.mxu0 0
    %2000 = vmatpush1.bf16.msra.mxu0 %v1859
    %2001 = vmatprep.subr.bf16.mxu0 0
    %2002 = vmatpush1.bf16.msra.mxu0 %v1860
    %2003 = vmatprep.subr.bf16.mxu0 0
    %2004 = vmatpush1.bf16.msra.mxu0 %v1861
    %2005 = vmatprep.subr.bf16.mxu0 0
    %2006 = vmatpush1.bf16.msra.mxu0 %v1862
    %2007 = vmatprep.mubr.bf16.mxu0 %v225
    %2008 = vmatmul.mubr.bf16.gmra.mrb[0].mxu0 %v224
    %v2009 = vpop.f32.mrb[0].mxu0
    %v2010 = vadd.f32 0.0, %v2009
    %v2011 = vpop.f32.mrb[0].mxu0
    %v2012 = vpop.f32.mrb[0].mxu0
    %v2013 = vpop.f32.mrb[0].mxu0
    %2014 = vdwg.mxu0
    %2015 = vmatprep.subr.bf16.mxu0 0
    %2016 = vmatpush1.bf16.msra.mxu0 %v1863
    %2017 = vmatprep.subr.bf16.mxu0 0
    %2018 = vmatpush1.bf16.msra.mxu0 %v1864
    %2019 = vmatprep.subr.bf16.mxu0 0
    %2020 = vmatpush1.bf16.msra.mxu0 %v1865
    %2021 = vmatprep.subr.bf16.mxu0 0
    %2022 = vmatpush1.bf16.msra.mxu0 %v1866
    %2023 = vmatprep.subr.bf16.mxu0 0
    %2024 = vmatpush1.bf16.msra.mxu0 %v1867
    %2025 = vmatprep.subr.bf16.mxu0 0
    %2026 = vmatpush1.bf16.msra.mxu0 %v1868
    %2027 = vmatprep.subr.bf16.mxu0 0
    %2028 = vmatpush1.bf16.msra.mxu0 %v1869
    %2029 = vmatprep.subr.bf16.mxu0 0
    %2030 = vmatpush1.bf16.msra.mxu0 %v1870
    %2031 = vmatprep.subr.bf16.mxu0 0
    %2032 = vmatpush1.bf16.msra.mxu0 %v1871
    %2033 = vmatprep.subr.bf16.mxu0 0
    %2034 = vmatpush1.bf16.msra.mxu0 %v1872
    %2035 = vmatprep.subr.bf16.mxu0 0
    %2036 = vmatpush1.bf16.msra.mxu0 %v1873
    %2037 = vmatprep.subr.bf16.mxu0 0
    %2038 = vmatpush1.bf16.msra.mxu0 %v1874
    %2039 = vmatprep.subr.bf16.mxu0 0
    %2040 = vmatpush1.bf16.msra.mxu0 %v1875
    %2041 = vmatprep.subr.bf16.mxu0 0
    %2042 = vmatpush1.bf16.msra.mxu0 %v1876
    %2043 = vmatprep.subr.bf16.mxu0 0
    %2044 = vmatpush1.bf16.msra.mxu0 %v1877
    %2045 = vmatprep.subr.bf16.mxu0 0
    %2046 = vmatpush1.bf16.msra.mxu0 %v1878
    %2047 = vmatprep.mubr.bf16.mxu0 %v227
    %2048 = vmatmul.mubr.bf16.gmra.mrb[0].mxu0 %v226
    %v2049 = vpop.f32.mrb[0].mxu0
    %v2050 = vadd.f32 %v2010, %v2049
    %v2051 = vpop.f32.mrb[0].mxu0
    %v2052 = vpop.f32.mrb[0].mxu0
    %v2053 = vpop.f32.mrb[0].mxu0
    %2054 = vdwg.mxu0
    %2055 = vmatprep.subr.bf16.mxu0 0
    %2056 = vmatpush1.bf16.msra.mxu0 %v1879
    %2057 = vmatprep.subr.bf16.mxu0 0
    %2058 = vmatpush1.bf16.msra.mxu0 %v1880
    %2059 = vmatprep.subr.bf16.mxu0 0
    %2060 = vmatpush1.bf16.msra.mxu0 %v1881
    %2061 = vmatprep.subr.bf16.mxu0 0
    %2062 = vmatpush1.bf16.msra.mxu0 %v1882
    %2063 = vmatprep.subr.bf16.mxu0 0
    %2064 = vmatpush1.bf16.msra.mxu0 %v1883
    %2065 = vmatprep.subr.bf16.mxu0 0
    %2066 = vmatpush1.bf16.msra.mxu0 %v1884
    %2067 = vmatprep.subr.bf16.mxu0 0
    %2068 = vmatpush1.bf16.msra.mxu0 %v1885
    %2069 = vmatprep.subr.bf16.mxu0 0
    %2070 = vmatpush1.bf16.msra.mxu0 %v1886
    %2071 = vmatprep.subr.bf16.mxu0 0
    %2072 = vmatpush1.bf16.msra.mxu0 %v1887
    %2073 = vmatprep.subr.bf16.mxu0 0
    %2074 = vmatpush1.bf16.msra.mxu0 %v1888
    %2075 = vmatprep.subr.bf16.mxu0 0
    %2076 = vmatpush1.bf16.msra.mxu0 %v1889
    %2077 = vmatprep.subr.bf16.mxu0 0
    %2078 = vmatpush1.bf16.msra.mxu0 %v1890
    %2079 = vmatprep.subr.bf16.mxu0 0
    %2080 = vmatpush1.bf16.msra.mxu0 %v1891
    %2081 = vmatprep.subr.bf16.mxu0 0
    %2082 = vmatpush1.bf16.msra.mxu0 %v1892
    %2083 = vmatprep.subr.bf16.mxu0 0
    %2084 = vmatpush1.bf16.msra.mxu0 %v1893
    %2085 = vmatprep.subr.bf16.mxu0 0
    %2086 = vmatpush1.bf16.msra.mxu0 %v1894
    %2087 = vmatprep.mubr.bf16.mxu0 %v229
    %2088 = vmatmul.mubr.bf16.gmra.mrb[0].mxu0 %v228
    %v2089 = vpop.f32.mrb[0].mxu0
    %v2090 = vadd.f32 %v2050, %v2089
    %v2091 = vpop.f32.mrb[0].mxu0
    %v2092 = vpop.f32.mrb[0].mxu0
    %v2093 = vpop.f32.mrb[0].mxu0
    %2094 = vdwg.mxu0
    %2095 = vmatprep.subr.bf16.mxu0 0
    %2096 = vmatpush1.bf16.msra.mxu0 %v1895
    %2097 = vmatprep.subr.bf16.mxu0 0
    %2098 = vmatpush1.bf16.msra.mxu0 %v1896
    %2099 = vmatprep.subr.bf16.mxu0 0
    %2100 = vmatpush1.bf16.msra.mxu0 %v1897
    %2101 = vmatprep.subr.bf16.mxu0 0
    %2102 = vmatpush1.bf16.msra.mxu0 %v1898
    %2103 = vmatprep.subr.bf16.mxu0 0
    %2104 = vmatpush1.bf16.msra.mxu0 %v1899
    %2105 = vmatprep.subr.bf16.mxu0 0
    %2106 = vmatpush1.bf16.msra.mxu0 %v1900
    %2107 = vmatprep.subr.bf16.mxu0 0
    %2108 = vmatpush1.bf16.msra.mxu0 %v1901
    %2109 = vmatprep.subr.bf16.mxu0 0
    %2110 = vmatpush1.bf16.msra.mxu0 %v1902
    %2111 = vmatprep.subr.bf16.mxu0 0
    %2112 = vmatpush1.bf16.msra.mxu0 %v1903
    %2113 = vmatprep.subr.bf16.mxu0 0
    %2114 = vmatpush1.bf16.msra.mxu0 %v1904
    %2115 = vmatprep.subr.bf16.mxu0 0
    %2116 = vmatpush1.bf16.msra.mxu0 %v1905
    %2117 = vmatprep.subr.bf16.mxu0 0
    %2118 = vmatpush1.bf16.msra.mxu0 %v1906
    %2119 = vmatprep.subr.bf16.mxu0 0
    %2120 = vmatpush1.bf16.msra.mxu0 %v1907
    %2121 = vmatprep.subr.bf16.mxu0 0
    %2122 = vmatpush1.bf16.msra.mxu0 %v1908
    %2123 = vmatprep.subr.bf16.mxu0 0
    %2124 = vmatpush1.bf16.msra.mxu0 %v1909
    %2125 = vmatprep.subr.bf16.mxu0 0
    %2126 = vmatpush1.bf16.msra.mxu0 %v1910
    %2127 = vmatprep.mubr.bf16.mxu0 %v231
    %2128 = vmatmul.mubr.bf16.gmra.mrb[0].mxu0 %v230
    %v2129 = vpop.f32.mrb[0].mxu0
    %v2130 = vadd.f32 %v2090, %v2129
    %v2131 = vpop.f32.mrb[0].mxu0
    %v2132 = vpop.f32.mrb[0].mxu0
    %v2133 = vpop.f32.mrb[0].mxu0
    %2134 = vdwg.mxu0
    %v2135 = vstv %s70
    %v2136 = vmul.f32 %v2130, %v2135
    %v2137 = vadd.f32 %v1461, %v2136
    %v2138 = vld [vmem:[%s3] sm:$0x1]
    %v2139 = vstv %s71
    %v2140 = vmul.f32 %v2138, %v2139
    %s2141 = scalar_lea.vmem %s3, 1
    %v2142 = vld [vmem:[%s2141] sm:$0x1]
    %v2143 = vstv %s72
    %v2144 = vmul.f32 %v2142, %v2143
    %v2145 = vadd.f32 %v2140, %v2144
    %s2146 = scalar_lea.vmem %s3, 2
    %v2147 = vld [vmem:[%s2146] sm:$0x1]
    %v2148 = vstv %s73
    %v2149 = vmul.f32 %v2147, %v2148
    %v2150 = vadd.f32 %v2145, %v2149
    %v2152 = vlaneseq
    %v2153 = vshrl.u32 %v2152, 7
    %v2154 = vsub.s32 0, %v2153
    %v2155 = vrot.slane %v2150, %v2154
    %v2157 = vadd.f32 %v2137, %v2155
    %v2158 = vmax.f32 %v2157, 0.0
    %v2159 = vpack.c.bf16 %v2158, %v2158
    %v2160 = vld [vmem:[#allocation6] sm:$0xff]
    %v2161 = vld [vmem:[#allocation6 + $0x8] sm:$0xff]
    %v2162 = vld [vmem:[#allocation6 + $0x10] sm:$0xff]
    %v2163 = vld [vmem:[#allocation6 + $0x18] sm:$0xff]
    %v2164 = vld [vmem:[#allocation6 + $0x20] sm:$0xff]
    %v2165 = vld [vmem:[#allocation6 + $0x28] sm:$0xff]
    %v2166 = vld [vmem:[#allocation6 + $0x30] sm:$0xff]
    %v2167 = vld [vmem:[#allocation6 + $0x38] sm:$0xff]
    %v2168 = vld [vmem:[#allocation6 + $0x40] sm:$0xff]
    %v2169 = vld [vmem:[#allocation6 + $0x48] sm:$0xff]
    %v2170 = vld [vmem:[#allocation6 + $0x50] sm:$0xff]
    %v2171 = vld [vmem:[#allocation6 + $0x58] sm:$0xff]
    %v2172 = vld [vmem:[#allocation6 + $0x60] sm:$0xff]
    %v2173 = vld [vmem:[#allocation6 + $0x68] sm:$0xff]
    %v2174 = vld [vmem:[#allocation6 + $0x70] sm:$0xff]
    %v2175 = vld [vmem:[#allocation6 + $0x78] sm:$0xff]
    %v2192 = vunpack.c.l.b16 %v2160
    %v2193 = vunpack.c.h.b16 %v2160
    %v2194 = vunpack.c.l.b16 %v2161
    %v2195 = vunpack.c.h.b16 %v2161
    %v2196 = vunpack.c.l.b16 %v2162
    %v2197 = vunpack.c.h.b16 %v2162
    %v2198 = vunpack.c.l.b16 %v2163
    %v2199 = vunpack.c.h.b16 %v2163
    %v2200 = vunpack.c.l.b16 %v2164
    %v2201 = vunpack.c.h.b16 %v2164
    %v2202 = vunpack.c.l.b16 %v2165
    %v2203 = vunpack.c.h.b16 %v2165
    %v2204 = vunpack.c.l.b16 %v2166
    %v2205 = vunpack.c.h.b16 %v2166
    %v2206 = vunpack.c.l.b16 %v2167
    %v2207 = vunpack.c.h.b16 %v2167
    %v2208 = vunpack.c.l.b16 %v2168
    %v2209 = vunpack.c.h.b16 %v2168
    %v2210 = vunpack.c.l.b16 %v2169
    %v2211 = vunpack.c.h.b16 %v2169
    %v2212 = vunpack.c.l.b16 %v2170
    %v2213 = vunpack.c.h.b16 %v2170
    %v2214 = vunpack.c.l.b16 %v2171
    %v2215 = vunpack.c.h.b16 %v2171
    %v2216 = vunpack.c.l.b16 %v2172
    %v2217 = vunpack.c.h.b16 %v2172
    %v2218 = vunpack.c.l.b16 %v2173
    %v2219 = vunpack.c.h.b16 %v2173
    %v2220 = vunpack.c.l.b16 %v2174
    %v2221 = vunpack.c.h.b16 %v2174
    %v2222 = vunpack.c.l.b16 %v2175
    %v2223 = vunpack.c.h.b16 %v2175
    %v2224 = vpack.c.b16 %v2194, %v2192
    %v2225 = vpack.c.b16 %v2195, %v2193
    %v2226 = vpack.c.b16 %v2198, %v2196
    %v2227 = vpack.c.b16 %v2199, %v2197
    %v2228 = vpack.c.b16 %v2202, %v2200
    %v2229 = vpack.c.b16 %v2203, %v2201
    %v2230 = vpack.c.b16 %v2206, %v2204
    %v2231 = vpack.c.b16 %v2207, %v2205
    %v2232 = vpack.c.b16 %v2210, %v2208
    %v2233 = vpack.c.b16 %v2211, %v2209
    %v2234 = vpack.c.b16 %v2214, %v2212
    %v2235 = vpack.c.b16 %v2215, %v2213
    %v2236 = vpack.c.b16 %v2218, %v2216
    %v2237 = vpack.c.b16 %v2219, %v2217
    %v2238 = vpack.c.b16 %v2222, %v2220
    %v2239 = vpack.c.b16 %v2223, %v2221
    %2256 = vmatprep.subr.bf16.mxu0 %v2225
    %2257 = vmatpush1.bf16.msra.mxu0 %v2224
    %2258 = vmatprep.subr.bf16.mxu0 %v2227
    %2259 = vmatpush1.bf16.msra.mxu0 %v2226
    %2260 = vmatprep.subr.bf16.mxu0 %v2229
    %2261 = vmatpush1.bf16.msra.mxu0 %v2228
    %2262 = vmatprep.subr.bf16.mxu0 %v2231
    %2263 = vmatpush1.bf16.msra.mxu0 %v2230
    %2264 = vmatprep.subr.bf16.mxu0 %v2233
    %2265 = vmatpush1.bf16.msra.mxu0 %v2232
    %2266 = vmatprep.subr.bf16.mxu0 %v2235
    %2267 = vmatpush1.bf16.msra.mxu0 %v2234
    %2268 = vmatprep.subr.bf16.mxu0 %v2237
    %2269 = vmatpush1.bf16.msra.mxu0 %v2236
    %2270 = vmatprep.subr.bf16.mxu0 %v2239
    %2271 = vmatpush1.bf16.msra.mxu0 %v2238
    %2272 = vmatprep.subr.bf16.mxu0 0
    %2273 = vmatpush1.bf16.msra.mxu0 0
    %2274 = vmatprep.subr.bf16.mxu0 0
    %2275 = vmatpush1.bf16.msra.mxu0 0
    %2276 = vmatprep.subr.bf16.mxu0 0
    %2277 = vmatpush1.bf16.msra.mxu0 0
    %2278 = vmatprep.subr.bf16.mxu0 0
    %2279 = vmatpush1.bf16.msra.mxu0 0
    %2280 = vmatprep.subr.bf16.mxu0 0
    %2281 = vmatpush1.bf16.msra.mxu0 0
    %2282 = vmatprep.subr.bf16.mxu0 0
    %2283 = vmatpush1.bf16.msra.mxu0 0
    %2284 = vmatprep.subr.bf16.mxu0 0
    %2285 = vmatpush1.bf16.msra.mxu0 0
    %2286 = vmatprep.subr.bf16.mxu0 0
    %2287 = vmatpush1.bf16.msra.mxu0 0
    %2288 = vmatprep.mubr.bf16.mxu0 0
    %2289 = vmatmul.mubr.bf16.gmra.mrb[0].mxu0 %v2159
    %v2290 = vpop.f32.mrb[0].mxu0
    %v2291 = vadd.f32 0.0, %v2290
    %v2292 = vpop.f32.mrb[0].mxu0
    %v2293 = vadd.f32 0.0, %v2292
    %v2294 = vpop.f32.mrb[0].mxu0
    %v2295 = vpop.f32.mrb[0].mxu0
    %2296 = vdwg.mxu0
    %v2297 = vstv %s74
    %v2298 = vmul.f32 %v2291, %v2297
    %v2299 = vmul.f32 %v2293, %v2297
    %s2300 = scalar_lea.vmem [#allocation6], 128
    %v2301 = vld [vmem:[%s2300] sm:$0xff]
    %v2302 = vld [vmem:[%s2300 + $0x8] sm:$0xff]
    %v2303 = vld [vmem:[%s2300 + $0x10] sm:$0xff]
    %v2304 = vld [vmem:[%s2300 + $0x18] sm:$0xff]
    %v2305 = vld [vmem:[%s2300 + $0x20] sm:$0xff]
    %v2306 = vld [vmem:[%s2300 + $0x28] sm:$0xff]
    %v2307 = vld [vmem:[%s2300 + $0x30] sm:$0xff]
    %v2308 = vld [vmem:[%s2300 + $0x38] sm:$0xff]
    %v2309 = vld [vmem:[%s2300 + $0x40] sm:$0xff]
    %v2310 = vld [vmem:[%s2300 + $0x48] sm:$0xff]
    %v2311 = vld [vmem:[%s2300 + $0x50] sm:$0xff]
    %v2312 = vld [vmem:[%s2300 + $0x58] sm:$0xff]
    %v2313 = vld [vmem:[%s2300 + $0x60] sm:$0xff]
    %v2314 = vld [vmem:[%s2300 + $0x68] sm:$0xff]
    %v2315 = vld [vmem:[%s2300 + $0x70] sm:$0xff]
    %v2316 = vld [vmem:[%s2300 + $0x78] sm:$0xff]
    %v2333 = vunpack.c.l.b16 %v2301
    %v2334 = vunpack.c.h.b16 %v2301
    %v2335 = vunpack.c.l.b16 %v2302
    %v2336 = vunpack.c.h.b16 %v2302
    %v2337 = vunpack.c.l.b16 %v2303
    %v2338 = vunpack.c.h.b16 %v2303
    %v2339 = vunpack.c.l.b16 %v2304
    %v2340 = vunpack.c.h.b16 %v2304
    %v2341 = vunpack.c.l.b16 %v2305
    %v2342 = vunpack.c.h.b16 %v2305
    %v2343 = vunpack.c.l.b16 %v2306
    %v2344 = vunpack.c.h.b16 %v2306
    %v2345 = vunpack.c.l.b16 %v2307
    %v2346 = vunpack.c.h.b16 %v2307
    %v2347 = vunpack.c.l.b16 %v2308
    %v2348 = vunpack.c.h.b16 %v2308
    %v2349 = vunpack.c.l.b16 %v2309
    %v2350 = vunpack.c.h.b16 %v2309
    %v2351 = vunpack.c.l.b16 %v2310
    %v2352 = vunpack.c.h.b16 %v2310
    %v2353 = vunpack.c.l.b16 %v2311
    %v2354 = vunpack.c.h.b16 %v2311
    %v2355 = vunpack.c.l.b16 %v2312
    %v2356 = vunpack.c.h.b16 %v2312
    %v2357 = vunpack.c.l.b16 %v2313
    %v2358 = vunpack.c.h.b16 %v2313
    %v2359 = vunpack.c.l.b16 %v2314
    %v2360 = vunpack.c.h.b16 %v2314
    %v2361 = vunpack.c.l.b16 %v2315
    %v2362 = vunpack.c.h.b16 %v2315
    %v2363 = vunpack.c.l.b16 %v2316
    %v2364 = vunpack.c.h.b16 %v2316
    %v2365 = vpack.c.b16 %v2335, %v2333
    %v2366 = vpack.c.b16 %v2336, %v2334
    %v2367 = vpack.c.b16 %v2339, %v2337
    %v2368 = vpack.c.b16 %v2340, %v2338
    %v2369 = vpack.c.b16 %v2343, %v2341
    %v2370 = vpack.c.b16 %v2344, %v2342
    %v2371 = vpack.c.b16 %v2347, %v2345
    %v2372 = vpack.c.b16 %v2348, %v2346
    %v2373 = vpack.c.b16 %v2351, %v2349
    %v2374 = vpack.c.b16 %v2352, %v2350
    %v2375 = vpack.c.b16 %v2355, %v2353
    %v2376 = vpack.c.b16 %v2356, %v2354
    %v2377 = vpack.c.b16 %v2359, %v2357
    %v2378 = vpack.c.b16 %v2360, %v2358
    %v2379 = vpack.c.b16 %v2363, %v2361
    %v2380 = vpack.c.b16 %v2364, %v2362
    %2397 = vmatprep.subr.bf16.mxu0 %v2366
    %2398 = vmatpush1.bf16.msra.mxu0 %v2365
    %2399 = vmatprep.subr.bf16.mxu0 %v2368
    %2400 = vmatpush1.bf16.msra.mxu0 %v2367
    %2401 = vmatprep.subr.bf16.mxu0 %v2370
    %2402 = vmatpush1.bf16.msra.mxu0 %v2369
    %2403 = vmatprep.subr.bf16.mxu0 %v2372
    %2404 = vmatpush1.bf16.msra.mxu0 %v2371
    %2405 = vmatprep.subr.bf16.mxu0 %v2374
    %2406 = vmatpush1.bf16.msra.mxu0 %v2373
    %2407 = vmatprep.subr.bf16.mxu0 %v2376
    %2408 = vmatpush1.bf16.msra.mxu0 %v2375
    %2409 = vmatprep.subr.bf16.mxu0 %v2378
    %2410 = vmatpush1.bf16.msra.mxu0 %v2377
    %2411 = vmatprep.subr.bf16.mxu0 %v2380
    %2412 = vmatpush1.bf16.msra.mxu0 %v2379
    %2413 = vmatprep.subr.bf16.mxu0 0
    %2414 = vmatpush1.bf16.msra.mxu0 0
    %2415 = vmatprep.subr.bf16.mxu0 0
    %2416 = vmatpush1.bf16.msra.mxu0 0
    %2417 = vmatprep.subr.bf16.mxu0 0
    %2418 = vmatpush1.bf16.msra.mxu0 0
    %2419 = vmatprep.subr.bf16.mxu0 0
    %2420 = vmatpush1.bf16.msra.mxu0 0
    %2421 = vmatprep.subr.bf16.mxu0 0
    %2422 = vmatpush1.bf16.msra.mxu0 0
    %2423 = vmatprep.subr.bf16.mxu0 0
    %2424 = vmatpush1.bf16.msra.mxu0 0
    %2425 = vmatprep.subr.bf16.mxu0 0
    %2426 = vmatpush1.bf16.msra.mxu0 0
    %2427 = vmatprep.subr.bf16.mxu0 0
    %2428 = vmatpush1.bf16.msra.mxu0 0
    %2429 = vmatprep.mubr.bf16.mxu0 0
    %2430 = vmatmul.mubr.bf16.gmra.mrb[0].mxu0 %v2159
    %v2431 = vpop.f32.mrb[0].mxu0
    %v2432 = vadd.f32 0.0, %v2431
    %v2433 = vpop.f32.mrb[0].mxu0
    %v2434 = vadd.f32 0.0, %v2433
    %v2435 = vpop.f32.mrb[0].mxu0
    %v2436 = vpop.f32.mrb[0].mxu0
    %2437 = vdwg.mxu0
    %v2438 = vstv %s75
    %v2439 = vmul.f32 %v2432, %v2438
    %v2440 = vmul.f32 %v2434, %v2438
    %v2441 = vadd.f32 %v2298, %v2439
    %v2442 = vadd.f32 %v2299, %v2440
    %s2443 = scalar_lea.vmem [#allocation6], 256
    %v2444 = vld [vmem:[%s2443] sm:$0xff]
    %v2445 = vld [vmem:[%s2443 + $0x8] sm:$0xff]
    %v2446 = vld [vmem:[%s2443 + $0x10] sm:$0xff]
    %v2447 = vld [vmem:[%s2443 + $0x18] sm:$0xff]
    %v2448 = vld [vmem:[%s2443 + $0x20] sm:$0xff]
    %v2449 = vld [vmem:[%s2443 + $0x28] sm:$0xff]
    %v2450 = vld [vmem:[%s2443 + $0x30] sm:$0xff]
    %v2451 = vld [vmem:[%s2443 + $0x38] sm:$0xff]
    %v2452 = vld [vmem:[%s2443 + $0x40] sm:$0xff]
    %v2453 = vld [vmem:[%s2443 + $0x48] sm:$0xff]
    %v2454 = vld [vmem:[%s2443 + $0x50] sm:$0xff]
    %v2455 = vld [vmem:[%s2443 + $0x58] sm:$0xff]
    %v2456 = vld [vmem:[%s2443 + $0x60] sm:$0xff]
    %v2457 = vld [vmem:[%s2443 + $0x68] sm:$0xff]
    %v2458 = vld [vmem:[%s2443 + $0x70] sm:$0xff]
    %v2459 = vld [vmem:[%s2443 + $0x78] sm:$0xff]
    %v2476 = vunpack.c.l.b16 %v2444
    %v2477 = vunpack.c.h.b16 %v2444
    %v2478 = vunpack.c.l.b16 %v2445
    %v2479 = vunpack.c.h.b16 %v2445
    %v2480 = vunpack.c.l.b16 %v2446
    %v2481 = vunpack.c.h.b16 %v2446
    %v2482 = vunpack.c.l.b16 %v2447
    %v2483 = vunpack.c.h.b16 %v2447
    %v2484 = vunpack.c.l.b16 %v2448
    %v2485 = vunpack.c.h.b16 %v2448
    %v2486 = vunpack.c.l.b16 %v2449
    %v2487 = vunpack.c.h.b16 %v2449
    %v2488 = vunpack.c.l.b16 %v2450
    %v2489 = vunpack.c.h.b16 %v2450
    %v2490 = vunpack.c.l.b16 %v2451
    %v2491 = vunpack.c.h.b16 %v2451
    %v2492 = vunpack.c.l.b16 %v2452
    %v2493 = vunpack.c.h.b16 %v2452
    %v2494 = vunpack.c.l.b16 %v2453
    %v2495 = vunpack.c.h.b16 %v2453
    %v2496 = vunpack.c.l.b16 %v2454
    %v2497 = vunpack.c.h.b16 %v2454
    %v2498 = vunpack.c.l.b16 %v2455
    %v2499 = vunpack.c.h.b16 %v2455
    %v2500 = vunpack.c.l.b16 %v2456
    %v2501 = vunpack.c.h.b16 %v2456
    %v2502 = vunpack.c.l.b16 %v2457
    %v2503 = vunpack.c.h.b16 %v2457
    %v2504 = vunpack.c.l.b16 %v2458
    %v2505 = vunpack.c.h.b16 %v2458
    %v2506 = vunpack.c.l.b16 %v2459
    %v2507 = vunpack.c.h.b16 %v2459
    %v2508 = vpack.c.b16 %v2478, %v2476
    %v2509 = vpack.c.b16 %v2479, %v2477
    %v2510 = vpack.c.b16 %v2482, %v2480
    %v2511 = vpack.c.b16 %v2483, %v2481
    %v2512 = vpack.c.b16 %v2486, %v2484
    %v2513 = vpack.c.b16 %v2487, %v2485
    %v2514 = vpack.c.b16 %v2490, %v2488
    %v2515 = vpack.c.b16 %v2491, %v2489
    %v2516 = vpack.c.b16 %v2494, %v2492
    %v2517 = vpack.c.b16 %v2495, %v2493
    %v2518 = vpack.c.b16 %v2498, %v2496
    %v2519 = vpack.c.b16 %v2499, %v2497
    %v2520 = vpack.c.b16 %v2502, %v2500
    %v2521 = vpack.c.b16 %v2503, %v2501
    %v2522 = vpack.c.b16 %v2506, %v2504
    %v2523 = vpack.c.b16 %v2507, %v2505
    %2540 = vmatprep.subr.bf16.mxu0 %v2509
    %2541 = vmatpush1.bf16.msra.mxu0 %v2508
    %2542 = vmatprep.subr.bf16.mxu0 %v2511
    %2543 = vmatpush1.bf16.msra.mxu0 %v2510
    %2544 = vmatprep.subr.bf16.mxu0 %v2513
    %2545 = vmatpush1.bf16.msra.mxu0 %v2512
    %2546 = vmatprep.subr.bf16.mxu0 %v2515
    %2547 = vmatpush1.bf16.msra.mxu0 %v2514
    %2548 = vmatprep.subr.bf16.mxu0 %v2517
    %2549 = vmatpush1.bf16.msra.mxu0 %v2516
    %2550 = vmatprep.subr.bf16.mxu0 %v2519
    %2551 = vmatpush1.bf16.msra.mxu0 %v2518
    %2552 = vmatprep.subr.bf16.mxu0 %v2521
    %2553 = vmatpush1.bf16.msra.mxu0 %v2520
    %2554 = vmatprep.subr.bf16.mxu0 %v2523
    %2555 = vmatpush1.bf16.msra.mxu0 %v2522
    %2556 = vmatprep.subr.bf16.mxu0 0
    %2557 = vmatpush1.bf16.msra.mxu0 0
    %2558 = vmatprep.subr.bf16.mxu0 0
    %2559 = vmatpush1.bf16.msra.mxu0 0
    %2560 = vmatprep.subr.bf16.mxu0 0
    %2561 = vmatpush1.bf16.msra.mxu0 0
    %2562 = vmatprep.subr.bf16.mxu0 0
    %2563 = vmatpush1.bf16.msra.mxu0 0
    %2564 = vmatprep.subr.bf16.mxu0 0
    %2565 = vmatpush1.bf16.msra.mxu0 0
    %2566 = vmatprep.subr.bf16.mxu0 0
    %2567 = vmatpush1.bf16.msra.mxu0 0
    %2568 = vmatprep.subr.bf16.mxu0 0
    %2569 = vmatpush1.bf16.msra.mxu0 0
    %2570 = vmatprep.subr.bf16.mxu0 0
    %2571 = vmatpush1.bf16.msra.mxu0 0
    %2572 = vmatprep.mubr.bf16.mxu0 0
    %2573 = vmatmul.mubr.bf16.gmra.mrb[0].mxu0 %v2159
    %v2574 = vpop.f32.mrb[0].mxu0
    %v2575 = vadd.f32 0.0, %v2574
    %v2576 = vpop.f32.mrb[0].mxu0
    %v2577 = vadd.f32 0.0, %v2576
    %v2578 = vpop.f32.mrb[0].mxu0
    %v2579 = vpop.f32.mrb[0].mxu0
    %2580 = vdwg.mxu0
    %v2581 = vstv %s76
    %v2582 = vmul.f32 %v2575, %v2581
    %v2583 = vmul.f32 %v2577, %v2581
    %v2584 = vadd.f32 %v2441, %v2582
    %v2585 = vadd.f32 %v2442, %v2583
    %v2586 = vld [vmem:[%s5] sm:$0x3]
    %v2587 = vstv %s77
    %v2588 = vmul.f32 %v2586, %v2587
    %s2589 = scalar_lea.vmem %s5, 2
    %v2590 = vld [vmem:[%s2589] sm:$0x3]
    %v2591 = vstv %s78
    %v2592 = vmul.f32 %v2590, %v2591
    %v2593 = vadd.f32 %v2588, %v2592
    %s2594 = scalar_lea.vmem %s5, 4
    %v2595 = vld [vmem:[%s2594] sm:$0x3]
    %v2596 = vstv %s79
    %v2597 = vmul.f32 %v2595, %v2596
    %v2598 = vadd.f32 %v2593, %v2597
    %v2600 = vlaneseq
    %v2601 = vshrl.u32 %v2600, 7
    %v2602 = vsub.s32 0, %v2601
    %v2603 = vrot.slane %v2598, %v2602
    %v2604 = vlaneseq
    %v2605 = vshrl.u32 %v2604, 7
    %v2606 = vsub.s32 1, %v2605
    %v2607 = vrot.slane %v2598, %v2606
    %v2610 = vadd.f32 %v2584, %v2603
    %v2611 = vadd.f32 %v2585, %v2607
    %v2612 = vld [vmem:[%s6] sm:$0x3]
    %v2614 = vlaneseq
    %v2615 = vshrl.u32 %v2614, 7
    %v2616 = vsub.s32 0, %v2615
    %v2617 = vrot.slane %v2612, %v2616
    %v2618 = vlaneseq
    %v2619 = vshrl.u32 %v2618, 7
    %v2620 = vsub.s32 1, %v2619
    %v2621 = vrot.slane %v2612, %v2620
    %v2624 = vadd.f32 %v2610, %v2617
    %v2625 = vadd.f32 %v2611, %v2621
    %2626 = vst [vmem:[%s7] sm:$0xff] %v2624
    %2627 = vst [vmem:[%s7 + $0x8] sm:$0xff] %v2625
    // Predicated region
    $region42: #{_forward_impl.1} parent=1 // pred_check
      _
    $region43: #{_forward_impl.1} parent=1 // pred_check_branch
      %2629 = sbr.rel (0) target = $region45
    $region44: #{_forward_impl.1} parent=1 // pred_region
      _
    $region45: #{_forward_impl.1} parent=1 // pred_fallthru
      _
    // Predicated region
    $region46: #{_forward_impl.1} parent=1 // pred_check
      _
    $region47: #{_forward_impl.1} parent=1 // pred_check_branch
      %2631 = sbr.rel (0) target = $region49
    $region48: #{_forward_impl.1} parent=1 // pred_region
      _
    $region49: #{_forward_impl.1} parent=1 // pred_fallthru
      _
    %2632 = vsyncpa [#allocation3], 1
    %2633 = vsyncpa [#allocation7], 1
    %2634 = vsyncpa [#allocation4], 1

</llo_original>
